<compile_context>
chip_gen: v6e
topology: v6e:2x2x1
jax: 0.10.0
libtpu: 0.0.40
codegen_flags: <defaults>
</compile_context>

<pallas_src>
import jax
import jax.numpy as jnp
import numpy as np
from jax.experimental import pallas as pl
from jax.experimental.pallas import tpu as pltpu

# -------------------- model sizes (small, consistent with the module) --------------------
H_DIM = 32          # kwargs['H_DIM']
CLASS_SIZE = 4      # kwargs['CLASS_SIZE']
EMB_DIM = 32        # stand-in for bert embedding dim (768) at small scale
ATTN_HID = 24       # fixed inside Attn
B = 2
T = 8


def rnnattn_kernel(x_ref,                      # (T*B, E)  time-major flattened embeddings
                   wihc_ref,                   # (E, 8H)   [fwd 4H | bwd 4H] input projection
                   bc_ref,                     # (1, 8H)   combined biases (b_ih + b_hh), both dirs
                   whhf_ref, whhb_ref,         # (H, 4H)   recurrent weights per direction
                   w1_ref, b1_ref,             # (H, 24), (1, 24)   Attn Linear 1
                   w2t_ref, b2_ref,            # (1, 24), (1, 1)    Attn Linear 2 (transposed)
                   wcls_ref, bcls_ref,         # (H, C),  (1, C)    classifier
                   logits_ref,                 # out: (B, C)
                   attn_ref):                  # out: (B, T)
    Bsz, Tlen = attn_ref.shape
    Hd = whhf_ref.shape[0]

    # ---------- hoisted input projection for both directions (single MXU matmul) ----------
    gx = (jnp.dot(x_ref[...], wihc_ref[...], preferred_element_type=jnp.float32)
          + bc_ref[...])                       # (T*B, 8H); [0:4H]=fwd gates, [4H:8H]=bwd gates

    whh_f = whhf_ref[...]
    whh_b = whhb_ref[...]

    h_f = jnp.zeros((Bsz, Hd), jnp.float32)
    c_f = jnp.zeros((Bsz, Hd), jnp.float32)
    h_b = jnp.zeros((Bsz, Hd), jnp.float32)
    c_b = jnp.zeros((Bsz, Hd), jnp.float32)

    enc_f = [None] * Tlen
    enc_b = [None] * Tlen

    # ---------- fused, fully-unrolled bidirectional recurrence ----------
    # PyTorch gate order (i, f, g, o); only h@whh remains on the serial dependency chain.
    for s in range(Tlen):
        r = Tlen - 1 - s
        gxf = gx[s * Bsz:(s + 1) * Bsz, 0:4 * Hd]             # (B, 4H)  fwd x-gates at t = s
        gxb = gx[r * Bsz:(r + 1) * Bsz, 4 * Hd:8 * Hd]        # (B, 4H)  bwd x-gates at t = r

        gf = gxf + jnp.dot(h_f, whh_f, preferred_element_type=jnp.float32)
        gb = gxb + jnp.dot(h_b, whh_b, preferred_element_type=jnp.float32)

        sgf = jax.nn.sigmoid(gf)               # one EUP pass over all four gate blocks
        sgb = jax.nn.sigmoid(gb)

        c_f = sgf[:, Hd:2 * Hd] * c_f + sgf[:, 0:Hd] * jnp.tanh(gf[:, 2 * Hd:3 * Hd])
        c_b = sgb[:, Hd:2 * Hd] * c_b + sgb[:, 0:Hd] * jnp.tanh(gb[:, 2 * Hd:3 * Hd])
        h_f = sgf[:, 3 * Hd:4 * Hd] * jnp.tanh(c_f)
        h_b = sgb[:, 3 * Hd:4 * Hd] * jnp.tanh(c_b)

        enc_f[s] = h_f                         # forward output for time s
        enc_b[r] = h_b                         # backward output for time r = T-1-s

    enc = [enc_f[t] + enc_b[t] for t in range(Tlen)]          # (B, H) per t  (fwd + bwd sum)
    enc_flat = jnp.concatenate(enc, axis=0)                   # (T*B, H)

    # ---------- batched attention MLP: Linear(H,24) -> ReLU -> Linear(24,1) ----------
    hid = jnp.maximum(
        jnp.dot(enc_flat, w1_ref[...], preferred_element_type=jnp.float32) + b1_ref[...],
        0.0)                                                  # (T*B, 24)
    scores_col = jnp.sum(hid * w2t_ref[...], axis=1, keepdims=True) + b2_ref[...]   # (T*B, 1)
    scores_bt = jnp.concatenate(
        [scores_col[t * Bsz:(t + 1) * Bsz, :] for t in range(Tlen)], axis=1)        # (B, T)

    # ---------- softmax over time (EUP reciprocal + one Newton refinement step) ----------
    m = jnp.max(scores_bt, axis=1, keepdims=True)
    e = jnp.exp(scores_bt - m)
    den = jnp.sum(e, axis=1, keepdims=True)
    inv = pl.reciprocal(den, approx=True)
    inv = inv * (2.0 - den * inv)              # Newton step: ~f32-exact, stays off the divide path
    attn_bt = e * inv                          # (B, T)
    attn_ref[...] = attn_bt

    # ---------- attention-weighted sum over time + classifier ----------
    feats = attn_bt[:, 0:1] * enc[0]
    for t in range(1, Tlen):
        feats = feats + attn_bt[:, t:t + 1] * enc[t]          # (B, H)

    logits_ref[...] = (jnp.dot(feats, wcls_ref[...], preferred_element_type=jnp.float32)
                       + bcls_ref[...])


@jax.jit
def rnn_attn_cls_forward(x, params):
    """x: (B, T, E) float32 embeddings. Returns (logits (B, C), attn (B, T, 1))."""
    Bsz, Tlen, E = x.shape
    Hd = params["whh_f"].shape[0]
    Cn = params["wcls"].shape[1]
    Ah = params["w1"].shape[1]

    # Time-major flatten + concatenated input-projection weights (tiny, done once by XLA).
    x_tm = jnp.transpose(x, (1, 0, 2)).reshape(Tlen * Bsz, E)
    wih_cat = jnp.concatenate([params["wih_f"], params["wih_b"]], axis=1)    # (E, 8H)
    b_cat = jnp.concatenate([params["b_f"], params["b_b"]], axis=1)          # (1, 8H)

    args = (x_tm, wih_cat, b_cat,
            params["whh_f"], params["whh_b"],
            params["w1"], params["b1"], params["w2t"], params["b2"],
            params["wcls"], params["bcls"])

    vmem = lambda: pl.BlockSpec(memory_space=pltpu.MemorySpace.VMEM)

    flops = (2 * Tlen * Bsz * E * 8 * Hd            # hoisted input projection
             + 2 * Tlen * 2 * Bsz * Hd * 4 * Hd     # recurrent h @ whh (both directions)
             + 2 * Tlen * Bsz * Hd * Ah             # attention Linear(H, 24)
             + 2 * Tlen * Bsz * Ah                  # attention Linear(24, 1)
             + 2 * Bsz * Hd * Cn)                   # classifier
    transcendentals = Tlen * 2 * Bsz * 6 * Hd + Bsz * Tlen + Bsz
    bytes_accessed = 4 * (sum(int(np.prod(a.shape)) for a in args)
                          + Bsz * Cn + Bsz * Tlen)

    logits, attn2d = pl.pallas_call(
        rnnattn_kernel,
        out_shape=(jax.ShapeDtypeStruct((Bsz, Cn), jnp.float32),
                   jax.ShapeDtypeStruct((Bsz, Tlen), jnp.float32)),
        in_specs=[vmem() for _ in args],
        out_specs=(vmem(), vmem()),
        cost_estimate=pl.CostEstimate(flops=flops,
                                      transcendentals=transcendentals,
                                      bytes_accessed=bytes_accessed),
    )(*args)
    return logits, attn2d[:, :, None]                          # attn as (B, T, 1), like torch


# -------------------- deterministic parameter init (synthetic, xavier-ish) --------------------
def init_params(key, e_dim, h_dim, c_num, attn_hid):
    def uni(k, shape, fan_in, fan_out, gain=np.sqrt(2.0)):
        lim = gain * np.sqrt(6.0 / (fan_in + fan_out))
        return jax.random.uniform(k, shape, jnp.float32, -lim, lim)

    ks = jax.random.split(key, 12)
    p = {
        "wih_f": uni(ks[0], (e_dim, 4 * h_dim), e_dim, 4 * h_dim),
        "whh_f": uni(ks[1], (h_dim, 4 * h_dim), h_dim, 4 * h_dim),
        "b_f":   uni(ks[2], (1, 4 * h_dim), 1, 4 * h_dim, gain=0.1),
        "wih_b": uni(ks[3], (e_dim, 4 * h_dim), e_dim, 4 * h_dim),
        "whh_b": uni(ks[4], (h_dim, 4 * h_dim), h_dim, 4 * h_dim),
        "b_b":   uni(ks[5], (1, 4 * h_dim), 1, 4 * h_dim, gain=0.1),
        "w1":    uni(ks[6], (h_dim, attn_hid), h_dim, attn_hid),
        "b1":    uni(ks[7], (1, attn_hid), 1, attn_hid, gain=0.1),
        "w2t":   uni(ks[8], (1, attn_hid), attn_hid, 1),      # Linear(24,1).weight, stored transposed
        "b2":    uni(ks[9], (1, 1), 1, 1, gain=0.1),
        "wcls":  uni(ks[10], (h_dim, c_num), h_dim, c_num),
        "bcls":  uni(ks[11], (1, c_num), 1, c_num, gain=0.1),
    }
    return p


# -------------------- pure-JAX reference (same math, no Pallas) --------------------
def reference_forward(x, p):
    Bsz, Tlen, _ = x.shape
    Hd = p["whh_f"].shape[0]

    def cell(x_t, h, c, wih, whh, b):
        g = x_t @ wih + h @ whh + b
        i = jax.nn.sigmoid(g[:, :Hd]); f = jax.nn.sigmoid(g[:, Hd:2 * Hd])
        gg = jnp.tanh(g[:, 2 * Hd:3 * Hd]); o = jax.nn.sigmoid(g[:, 3 * Hd:])
        c = f * c + i * gg
        return o * jnp.tanh(c), c

    h = jnp.zeros((Bsz, Hd)); c = jnp.zeros((Bsz, Hd))
    outs_f = []
    for t in range(Tlen):
        h, c = cell(x[:, t], h, c, p["wih_f"], p["whh_f"], p["b_f"])
        outs_f.append(h)
    h = jnp.zeros((Bsz, Hd)); c = jnp.zeros((Bsz, Hd))
    outs_b = [None] * Tlen
    for t in reversed(range(Tlen)):
        h, c = cell(x[:, t], h, c, p["wih_b"], p["whh_b"], p["b_b"])
        outs_b[t] = h
    enc = jnp.stack([outs_f[t] + outs_b[t] for t in range(Tlen)], axis=1)   # (B,T,H)

    hid = jax.nn.relu(enc.reshape(-1, Hd) @ p["w1"] + p["b1"])
    scores = (hid @ p["w2t"].T + p["b2"]).reshape(Bsz, Tlen)
    attn = jax.nn.softmax(scores, axis=1)
    feats = (enc * attn[:, :, None]).sum(axis=1)
    logits = feats @ p["wcls"] + p["bcls"]
    return logits, attn[:, :, None]


if __name__ == "__main__":
    key = jax.random.PRNGKey(0)
    kx, kp = jax.random.split(key)
    # TODO(synk): BERT tokenizer/embedding lookup is host-side preprocessing; input is already embedded.
    x = jax.random.normal(kx, (B, T, EMB_DIM), jnp.float32)
    params = init_params(kp, EMB_DIM, H_DIM, CLASS_SIZE, ATTN_HID)

    logits, attn = rnn_attn_cls_forward(x, params)
    logits = jax.block_until_ready(logits)
    attn = jax.block_until_ready(attn)

    ref_logits, ref_attn = reference_forward(x, params)
    np.testing.assert_allclose(np.asarray(logits), np.asarray(ref_logits), rtol=1e-3, atol=1e-3)
    np.testing.assert_allclose(np.asarray(attn), np.asarray(ref_attn), rtol=1e-3, atol=1e-3)
    assert logits.shape == (B, CLASS_SIZE) and attn.shape == (B, T, 1)

    print("KERNEL_OK")
</pallas_src>

<mosaic_0001>
module attributes {stable_mosaic.version = 11 : i64} {
  func.func @rnnattn_kernel(%arg0: memref<16x32xf32, #tpu.memory_space<vmem>>, %arg1: memref<32x256xf32, #tpu.memory_space<vmem>>, %arg2: memref<1x256xf32, #tpu.memory_space<vmem>>, %arg3: memref<32x128xf32, #tpu.memory_space<vmem>>, %arg4: memref<32x128xf32, #tpu.memory_space<vmem>>, %arg5: memref<32x24xf32, #tpu.memory_space<vmem>>, %arg6: memref<1x24xf32, #tpu.memory_space<vmem>>, %arg7: memref<1x24xf32, #tpu.memory_space<vmem>>, %arg8: memref<1x1xf32, #tpu.memory_space<vmem>>, %arg9: memref<32x4xf32, #tpu.memory_space<vmem>>, %arg10: memref<1x4xf32, #tpu.memory_space<vmem>>, %arg11: memref<2x4xf32, #tpu.memory_space<vmem>>, %arg12: memref<2x8xf32, #tpu.memory_space<vmem>>) attributes {dimension_semantics = [], scalar_prefetch = 0 : i64, scratch_operands = 0 : i64, tpu.core_type = #tpu.core_type<tc>} {
    %c0 = arith.constant 0 : index
    %c0_0 = arith.constant 0 : index
    %0 = vector.load %arg0[%c0, %c0_0] : memref<16x32xf32, #tpu.memory_space<vmem>>, vector<16x32xf32>
    %c0_1 = arith.constant 0 : index
    %c0_2 = arith.constant 0 : index
    %1 = vector.load %arg1[%c0_1, %c0_2] : memref<32x256xf32, #tpu.memory_space<vmem>>, vector<32x256xf32>
    %cst = arith.constant dense<0.000000e+00> : vector<16x256xf32>
    %2 = tpu.matmul %0, %1, %cst {dimension_numbers = #tpu.dot_dimension_numbers<[1], [0], [0], [1], [0, 0, 1, 1], [], []>} : vector<16x32xf32>, vector<32x256xf32>, vector<16x256xf32> -> vector<16x256xf32>
    %c0_3 = arith.constant 0 : index
    %c0_4 = arith.constant 0 : index
    %3 = vector.load %arg2[%c0_3, %c0_4] : memref<1x256xf32, #tpu.memory_space<vmem>>, vector<1x256xf32>
    %4 = vector.broadcast %3 : vector<1x256xf32> to vector<16x256xf32>
    %5 = arith.addf %2, %4 : vector<16x256xf32>
    %c0_5 = arith.constant 0 : index
    %c0_6 = arith.constant 0 : index
    %6 = vector.load %arg3[%c0_5, %c0_6] : memref<32x128xf32, #tpu.memory_space<vmem>>, vector<32x128xf32>
    %c0_7 = arith.constant 0 : index
    %c0_8 = arith.constant 0 : index
    %7 = vector.load %arg4[%c0_7, %c0_8] : memref<32x128xf32, #tpu.memory_space<vmem>>, vector<32x128xf32>
    %cst_9 = arith.constant 0.000000e+00 : f32
    %8 = vector.broadcast %cst_9 : f32 to vector<2x32xf32>
    %cst_10 = arith.constant 0.000000e+00 : f32
    %9 = vector.broadcast %cst_10 : f32 to vector<2x32xf32>
    %cst_11 = arith.constant 0.000000e+00 : f32
    %10 = vector.broadcast %cst_11 : f32 to vector<2x32xf32>
    %cst_12 = arith.constant 0.000000e+00 : f32
    %11 = vector.broadcast %cst_12 : f32 to vector<2x32xf32>
    %12 = vector.extract_strided_slice %5 {offsets = [0, 0], sizes = [2, 128], strides = [1, 1]} : vector<16x256xf32> to vector<2x128xf32>
    %13 = vector.extract_strided_slice %5 {offsets = [14, 128], sizes = [2, 128], strides = [1, 1]} : vector<16x256xf32> to vector<2x128xf32>
    %cst_13 = arith.constant dense<0.000000e+00> : vector<2x128xf32>
    %14 = tpu.matmul %8, %6, %cst_13 {dimension_numbers = #tpu.dot_dimension_numbers<[1], [0], [0], [1], [0, 0, 1, 1], [], []>} : vector<2x32xf32>, vector<32x128xf32>, vector<2x128xf32> -> vector<2x128xf32>
    %15 = arith.addf %12, %14 : vector<2x128xf32>
    %cst_14 = arith.constant dense<0.000000e+00> : vector<2x128xf32>
    %16 = tpu.matmul %10, %7, %cst_14 {dimension_numbers = #tpu.dot_dimension_numbers<[1], [0], [0], [1], [0, 0, 1, 1], [], []>} : vector<2x32xf32>, vector<32x128xf32>, vector<2x128xf32> -> vector<2x128xf32>
    %17 = arith.addf %13, %16 : vector<2x128xf32>
    %18 = arith.negf %15 : vector<2x128xf32>
    %19 = math.exp %18 : vector<2x128xf32>
    %cst_15 = arith.constant 1.000000e+00 : f32
    %20 = vector.broadcast %cst_15 : f32 to vector<2x128xf32>
    %21 = arith.addf %20, %19 : vector<2x128xf32>
    %22 = arith.divf %20, %21 : vector<2x128xf32>
    %23 = arith.negf %17 : vector<2x128xf32>
    %24 = math.exp %23 : vector<2x128xf32>
    %cst_16 = arith.constant 1.000000e+00 : f32
    %25 = vector.broadcast %cst_16 : f32 to vector<2x128xf32>
    %26 = arith.addf %25, %24 : vector<2x128xf32>
    %27 = arith.divf %25, %26 : vector<2x128xf32>
    %28 = vector.extract_strided_slice %22 {offsets = [0, 32], sizes = [2, 32], strides = [1, 1]} : vector<2x128xf32> to vector<2x32xf32>
    %29 = arith.mulf %28, %9 : vector<2x32xf32>
    %30 = vector.extract_strided_slice %22 {offsets = [0, 0], sizes = [2, 32], strides = [1, 1]} : vector<2x128xf32> to vector<2x32xf32>
    %31 = vector.extract_strided_slice %15 {offsets = [0, 64], sizes = [2, 32], strides = [1, 1]} : vector<2x128xf32> to vector<2x32xf32>
    %32 = math.tanh %31 : vector<2x32xf32>
    %33 = arith.mulf %30, %32 : vector<2x32xf32>
    %34 = arith.addf %29, %33 : vector<2x32xf32>
    %35 = vector.extract_strided_slice %27 {offsets = [0, 32], sizes = [2, 32], strides = [1, 1]} : vector<2x128xf32> to vector<2x32xf32>
    %36 = arith.mulf %35, %11 : vector<2x32xf32>
    %37 = vector.extract_strided_slice %27 {offsets = [0, 0], sizes = [2, 32], strides = [1, 1]} : vector<2x128xf32> to vector<2x32xf32>
    %38 = vector.extract_strided_slice %17 {offsets = [0, 64], sizes = [2, 32], strides = [1, 1]} : vector<2x128xf32> to vector<2x32xf32>
    %39 = math.tanh %38 : vector<2x32xf32>
    %40 = arith.mulf %37, %39 : vector<2x32xf32>
    %41 = arith.addf %36, %40 : vector<2x32xf32>
    %42 = vector.extract_strided_slice %22 {offsets = [0, 96], sizes = [2, 32], strides = [1, 1]} : vector<2x128xf32> to vector<2x32xf32>
    %43 = math.tanh %34 : vector<2x32xf32>
    %44 = arith.mulf %42, %43 : vector<2x32xf32>
    %45 = vector.extract_strided_slice %27 {offsets = [0, 96], sizes = [2, 32], strides = [1, 1]} : vector<2x128xf32> to vector<2x32xf32>
    %46 = math.tanh %41 : vector<2x32xf32>
    %47 = arith.mulf %45, %46 : vector<2x32xf32>
    %48 = vector.extract_strided_slice %5 {offsets = [2, 0], sizes = [2, 128], strides = [1, 1]} : vector<16x256xf32> to vector<2x128xf32>
    %49 = vector.extract_strided_slice %5 {offsets = [12, 128], sizes = [2, 128], strides = [1, 1]} : vector<16x256xf32> to vector<2x128xf32>
    %cst_17 = arith.constant dense<0.000000e+00> : vector<2x128xf32>
    %50 = tpu.matmul %44, %6, %cst_17 {dimension_numbers = #tpu.dot_dimension_numbers<[1], [0], [0], [1], [0, 0, 1, 1], [], []>} : vector<2x32xf32>, vector<32x128xf32>, vector<2x128xf32> -> vector<2x128xf32>
    %51 = arith.addf %48, %50 : vector<2x128xf32>
    %cst_18 = arith.constant dense<0.000000e+00> : vector<2x128xf32>
    %52 = tpu.matmul %47, %7, %cst_18 {dimension_numbers = #tpu.dot_dimension_numbers<[1], [0], [0], [1], [0, 0, 1, 1], [], []>} : vector<2x32xf32>, vector<32x128xf32>, vector<2x128xf32> -> vector<2x128xf32>
    %53 = arith.addf %49, %52 : vector<2x128xf32>
    %54 = arith.negf %51 : vector<2x128xf32>
    %55 = math.exp %54 : vector<2x128xf32>
    %cst_19 = arith.constant 1.000000e+00 : f32
    %56 = vector.broadcast %cst_19 : f32 to vector<2x128xf32>
    %57 = arith.addf %56, %55 : vector<2x128xf32>
    %58 = arith.divf %56, %57 : vector<2x128xf32>
    %59 = arith.negf %53 : vector<2x128xf32>
    %60 = math.exp %59 : vector<2x128xf32>
    %cst_20 = arith.constant 1.000000e+00 : f32
    %61 = vector.broadcast %cst_20 : f32 to vector<2x128xf32>
    %62 = arith.addf %61, %60 : vector<2x128xf32>
    %63 = arith.divf %61, %62 : vector<2x128xf32>
    %64 = vector.extract_strided_slice %58 {offsets = [0, 32], sizes = [2, 32], strides = [1, 1]} : vector<2x128xf32> to vector<2x32xf32>
    %65 = arith.mulf %64, %34 : vector<2x32xf32>
    %66 = vector.extract_strided_slice %58 {offsets = [0, 0], sizes = [2, 32], strides = [1, 1]} : vector<2x128xf32> to vector<2x32xf32>
    %67 = vector.extract_strided_slice %51 {offsets = [0, 64], sizes = [2, 32], strides = [1, 1]} : vector<2x128xf32> to vector<2x32xf32>
    %68 = math.tanh %67 : vector<2x32xf32>
    %69 = arith.mulf %66, %68 : vector<2x32xf32>
    %70 = arith.addf %65, %69 : vector<2x32xf32>
    %71 = vector.extract_strided_slice %63 {offsets = [0, 32], sizes = [2, 32], strides = [1, 1]} : vector<2x128xf32> to vector<2x32xf32>
    %72 = arith.mulf %71, %41 : vector<2x32xf32>
    %73 = vector.extract_strided_slice %63 {offsets = [0, 0], sizes = [2, 32], strides = [1, 1]} : vector<2x128xf32> to vector<2x32xf32>
    %74 = vector.extract_strided_slice %53 {offsets = [0, 64], sizes = [2, 32], strides = [1, 1]} : vector<2x128xf32> to vector<2x32xf32>
    %75 = math.tanh %74 : vector<2x32xf32>
    %76 = arith.mulf %73, %75 : vector<2x32xf32>
    %77 = arith.addf %72, %76 : vector<2x32xf32>
    %78 = vector.extract_strided_slice %58 {offsets = [0, 96], sizes = [2, 32], strides = [1, 1]} : vector<2x128xf32> to vector<2x32xf32>
    %79 = math.tanh %70 : vector<2x32xf32>
    %80 = arith.mulf %78, %79 : vector<2x32xf32>
    %81 = vector.extract_strided_slice %63 {offsets = [0, 96], sizes = [2, 32], strides = [1, 1]} : vector<2x128xf32> to vector<2x32xf32>
    %82 = math.tanh %77 : vector<2x32xf32>
    %83 = arith.mulf %81, %82 : vector<2x32xf32>
    %84 = vector.extract_strided_slice %5 {offsets = [4, 0], sizes = [2, 128], strides = [1, 1]} : vector<16x256xf32> to vector<2x128xf32>
    %85 = vector.extract_strided_slice %5 {offsets = [10, 128], sizes = [2, 128], strides = [1, 1]} : vector<16x256xf32> to vector<2x128xf32>
    %cst_21 = arith.constant dense<0.000000e+00> : vector<2x128xf32>
    %86 = tpu.matmul %80, %6, %cst_21 {dimension_numbers = #tpu.dot_dimension_numbers<[1], [0], [0], [1], [0, 0, 1, 1], [], []>} : vector<2x32xf32>, vector<32x128xf32>, vector<2x128xf32> -> vector<2x128xf32>
    %87 = arith.addf %84, %86 : vector<2x128xf32>
    %cst_22 = arith.constant dense<0.000000e+00> : vector<2x128xf32>
    %88 = tpu.matmul %83, %7, %cst_22 {dimension_numbers = #tpu.dot_dimension_numbers<[1], [0], [0], [1], [0, 0, 1, 1], [], []>} : vector<2x32xf32>, vector<32x128xf32>, vector<2x128xf32> -> vector<2x128xf32>
    %89 = arith.addf %85, %88 : vector<2x128xf32>
    %90 = arith.negf %87 : vector<2x128xf32>
    %91 = math.exp %90 : vector<2x128xf32>
    %cst_23 = arith.constant 1.000000e+00 : f32
    %92 = vector.broadcast %cst_23 : f32 to vector<2x128xf32>
    %93 = arith.addf %92, %91 : vector<2x128xf32>
    %94 = arith.divf %92, %93 : vector<2x128xf32>
    %95 = arith.negf %89 : vector<2x128xf32>
    %96 = math.exp %95 : vector<2x128xf32>
    %cst_24 = arith.constant 1.000000e+00 : f32
    %97 = vector.broadcast %cst_24 : f32 to vector<2x128xf32>
    %98 = arith.addf %97, %96 : vector<2x128xf32>
    %99 = arith.divf %97, %98 : vector<2x128xf32>
    %100 = vector.extract_strided_slice %94 {offsets = [0, 32], sizes = [2, 32], strides = [1, 1]} : vector<2x128xf32> to vector<2x32xf32>
    %101 = arith.mulf %100, %70 : vector<2x32xf32>
    %102 = vector.extract_strided_slice %94 {offsets = [0, 0], sizes = [2, 32], strides = [1, 1]} : vector<2x128xf32> to vector<2x32xf32>
    %103 = vector.extract_strided_slice %87 {offsets = [0, 64], sizes = [2, 32], strides = [1, 1]} : vector<2x128xf32> to vector<2x32xf32>
    %104 = math.tanh %103 : vector<2x32xf32>
    %105 = arith.mulf %102, %104 : vector<2x32xf32>
    %106 = arith.addf %101, %105 : vector<2x32xf32>
    %107 = vector.extract_strided_slice %99 {offsets = [0, 32], sizes = [2, 32], strides = [1, 1]} : vector<2x128xf32> to vector<2x32xf32>
    %108 = arith.mulf %107, %77 : vector<2x32xf32>
    %109 = vector.extract_strided_slice %99 {offsets = [0, 0], sizes = [2, 32], strides = [1, 1]} : vector<2x128xf32> to vector<2x32xf32>
    %110 = vector.extract_strided_slice %89 {offsets = [0, 64], sizes = [2, 32], strides = [1, 1]} : vector<2x128xf32> to vector<2x32xf32>
    %111 = math.tanh %110 : vector<2x32xf32>
    %112 = arith.mulf %109, %111 : vector<2x32xf32>
    %113 = arith.addf %108, %112 : vector<2x32xf32>
    %114 = vector.extract_strided_slice %94 {offsets = [0, 96], sizes = [2, 32], strides = [1, 1]} : vector<2x128xf32> to vector<2x32xf32>
    %115 = math.tanh %106 : vector<2x32xf32>
    %116 = arith.mulf %114, %115 : vector<2x32xf32>
    %117 = vector.extract_strided_slice %99 {offsets = [0, 96], sizes = [2, 32], strides = [1, 1]} : vector<2x128xf32> to vector<2x32xf32>
    %118 = math.tanh %113 : vector<2x32xf32>
    %119 = arith.mulf %117, %118 : vector<2x32xf32>
    %120 = vector.extract_strided_slice %5 {offsets = [6, 0], sizes = [2, 128], strides = [1, 1]} : vector<16x256xf32> to vector<2x128xf32>
    %121 = vector.extract_strided_slice %5 {offsets = [8, 128], sizes = [2, 128], strides = [1, 1]} : vector<16x256xf32> to vector<2x128xf32>
    %cst_25 = arith.constant dense<0.000000e+00> : vector<2x128xf32>
    %122 = tpu.matmul %116, %6, %cst_25 {dimension_numbers = #tpu.dot_dimension_numbers<[1], [0], [0], [1], [0, 0, 1, 1], [], []>} : vector<2x32xf32>, vector<32x128xf32>, vector<2x128xf32> -> vector<2x128xf32>
    %123 = arith.addf %120, %122 : vector<2x128xf32>
    %cst_26 = arith.constant dense<0.000000e+00> : vector<2x128xf32>
    %124 = tpu.matmul %119, %7, %cst_26 {dimension_numbers = #tpu.dot_dimension_numbers<[1], [0], [0], [1], [0, 0, 1, 1], [], []>} : vector<2x32xf32>, vector<32x128xf32>, vector<2x128xf32> -> vector<2x128xf32>
    %125 = arith.addf %121, %124 : vector<2x128xf32>
    %126 = arith.negf %123 : vector<2x128xf32>
    %127 = math.exp %126 : vector<2x128xf32>
    %cst_27 = arith.constant 1.000000e+00 : f32
    %128 = vector.broadcast %cst_27 : f32 to vector<2x128xf32>
    %129 = arith.addf %128, %127 : vector<2x128xf32>
    %130 = arith.divf %128, %129 : vector<2x128xf32>
    %131 = arith.negf %125 : vector<2x128xf32>
    %132 = math.exp %131 : vector<2x128xf32>
    %cst_28 = arith.constant 1.000000e+00 : f32
    %133 = vector.broadcast %cst_28 : f32 to vector<2x128xf32>
    %134 = arith.addf %133, %132 : vector<2x128xf32>
    %135 = arith.divf %133, %134 : vector<2x128xf32>
    %136 = vector.extract_strided_slice %130 {offsets = [0, 32], sizes = [2, 32], strides = [1, 1]} : vector<2x128xf32> to vector<2x32xf32>
    %137 = arith.mulf %136, %106 : vector<2x32xf32>
    %138 = vector.extract_strided_slice %130 {offsets = [0, 0], sizes = [2, 32], strides = [1, 1]} : vector<2x128xf32> to vector<2x32xf32>
    %139 = vector.extract_strided_slice %123 {offsets = [0, 64], sizes = [2, 32], strides = [1, 1]} : vector<2x128xf32> to vector<2x32xf32>
    %140 = math.tanh %139 : vector<2x32xf32>
    %141 = arith.mulf %138, %140 : vector<2x32xf32>
    %142 = arith.addf %137, %141 : vector<2x32xf32>
    %143 = vector.extract_strided_slice %135 {offsets = [0, 32], sizes = [2, 32], strides = [1, 1]} : vector<2x128xf32> to vector<2x32xf32>
    %144 = arith.mulf %143, %113 : vector<2x32xf32>
    %145 = vector.extract_strided_slice %135 {offsets = [0, 0], sizes = [2, 32], strides = [1, 1]} : vector<2x128xf32> to vector<2x32xf32>
    %146 = vector.extract_strided_slice %125 {offsets = [0, 64], sizes = [2, 32], strides = [1, 1]} : vector<2x128xf32> to vector<2x32xf32>
    %147 = math.tanh %146 : vector<2x32xf32>
    %148 = arith.mulf %145, %147 : vector<2x32xf32>
    %149 = arith.addf %144, %148 : vector<2x32xf32>
    %150 = vector.extract_strided_slice %130 {offsets = [0, 96], sizes = [2, 32], strides = [1, 1]} : vector<2x128xf32> to vector<2x32xf32>
    %151 = math.tanh %142 : vector<2x32xf32>
    %152 = arith.mulf %150, %151 : vector<2x32xf32>
    %153 = vector.extract_strided_slice %135 {offsets = [0, 96], sizes = [2, 32], strides = [1, 1]} : vector<2x128xf32> to vector<2x32xf32>
    %154 = math.tanh %149 : vector<2x32xf32>
    %155 = arith.mulf %153, %154 : vector<2x32xf32>
    %156 = vector.extract_strided_slice %5 {offsets = [8, 0], sizes = [2, 128], strides = [1, 1]} : vector<16x256xf32> to vector<2x128xf32>
    %157 = vector.extract_strided_slice %5 {offsets = [6, 128], sizes = [2, 128], strides = [1, 1]} : vector<16x256xf32> to vector<2x128xf32>
    %cst_29 = arith.constant dense<0.000000e+00> : vector<2x128xf32>
    %158 = tpu.matmul %152, %6, %cst_29 {dimension_numbers = #tpu.dot_dimension_numbers<[1], [0], [0], [1], [0, 0, 1, 1], [], []>} : vector<2x32xf32>, vector<32x128xf32>, vector<2x128xf32> -> vector<2x128xf32>
    %159 = arith.addf %156, %158 : vector<2x128xf32>
    %cst_30 = arith.constant dense<0.000000e+00> : vector<2x128xf32>
    %160 = tpu.matmul %155, %7, %cst_30 {dimension_numbers = #tpu.dot_dimension_numbers<[1], [0], [0], [1], [0, 0, 1, 1], [], []>} : vector<2x32xf32>, vector<32x128xf32>, vector<2x128xf32> -> vector<2x128xf32>
    %161 = arith.addf %157, %160 : vector<2x128xf32>
    %162 = arith.negf %159 : vector<2x128xf32>
    %163 = math.exp %162 : vector<2x128xf32>
    %cst_31 = arith.constant 1.000000e+00 : f32
    %164 = vector.broadcast %cst_31 : f32 to vector<2x128xf32>
    %165 = arith.addf %164, %163 : vector<2x128xf32>
    %166 = arith.divf %164, %165 : vector<2x128xf32>
    %167 = arith.negf %161 : vector<2x128xf32>
    %168 = math.exp %167 : vector<2x128xf32>
    %cst_32 = arith.constant 1.000000e+00 : f32
    %169 = vector.broadcast %cst_32 : f32 to vector<2x128xf32>
    %170 = arith.addf %169, %168 : vector<2x128xf32>
    %171 = arith.divf %169, %170 : vector<2x128xf32>
    %172 = vector.extract_strided_slice %166 {offsets = [0, 32], sizes = [2, 32], strides = [1, 1]} : vector<2x128xf32> to vector<2x32xf32>
    %173 = arith.mulf %172, %142 : vector<2x32xf32>
    %174 = vector.extract_strided_slice %166 {offsets = [0, 0], sizes = [2, 32], strides = [1, 1]} : vector<2x128xf32> to vector<2x32xf32>
    %175 = vector.extract_strided_slice %159 {offsets = [0, 64], sizes = [2, 32], strides = [1, 1]} : vector<2x128xf32> to vector<2x32xf32>
    %176 = math.tanh %175 : vector<2x32xf32>
    %177 = arith.mulf %174, %176 : vector<2x32xf32>
    %178 = arith.addf %173, %177 : vector<2x32xf32>
    %179 = vector.extract_strided_slice %171 {offsets = [0, 32], sizes = [2, 32], strides = [1, 1]} : vector<2x128xf32> to vector<2x32xf32>
    %180 = arith.mulf %179, %149 : vector<2x32xf32>
    %181 = vector.extract_strided_slice %171 {offsets = [0, 0], sizes = [2, 32], strides = [1, 1]} : vector<2x128xf32> to vector<2x32xf32>
    %182 = vector.extract_strided_slice %161 {offsets = [0, 64], sizes = [2, 32], strides = [1, 1]} : vector<2x128xf32> to vector<2x32xf32>
    %183 = math.tanh %182 : vector<2x32xf32>
    %184 = arith.mulf %181, %183 : vector<2x32xf32>
    %185 = arith.addf %180, %184 : vector<2x32xf32>
    %186 = vector.extract_strided_slice %166 {offsets = [0, 96], sizes = [2, 32], strides = [1, 1]} : vector<2x128xf32> to vector<2x32xf32>
    %187 = math.tanh %178 : vector<2x32xf32>
    %188 = arith.mulf %186, %187 : vector<2x32xf32>
    %189 = vector.extract_strided_slice %171 {offsets = [0, 96], sizes = [2, 32], strides = [1, 1]} : vector<2x128xf32> to vector<2x32xf32>
    %190 = math.tanh %185 : vector<2x32xf32>
    %191 = arith.mulf %189, %190 : vector<2x32xf32>
    %192 = vector.extract_strided_slice %5 {offsets = [10, 0], sizes = [2, 128], strides = [1, 1]} : vector<16x256xf32> to vector<2x128xf32>
    %193 = vector.extract_strided_slice %5 {offsets = [4, 128], sizes = [2, 128], strides = [1, 1]} : vector<16x256xf32> to vector<2x128xf32>
    %cst_33 = arith.constant dense<0.000000e+00> : vector<2x128xf32>
    %194 = tpu.matmul %188, %6, %cst_33 {dimension_numbers = #tpu.dot_dimension_numbers<[1], [0], [0], [1], [0, 0, 1, 1], [], []>} : vector<2x32xf32>, vector<32x128xf32>, vector<2x128xf32> -> vector<2x128xf32>
    %195 = arith.addf %192, %194 : vector<2x128xf32>
    %cst_34 = arith.constant dense<0.000000e+00> : vector<2x128xf32>
    %196 = tpu.matmul %191, %7, %cst_34 {dimension_numbers = #tpu.dot_dimension_numbers<[1], [0], [0], [1], [0, 0, 1, 1], [], []>} : vector<2x32xf32>, vector<32x128xf32>, vector<2x128xf32> -> vector<2x128xf32>
    %197 = arith.addf %193, %196 : vector<2x128xf32>
    %198 = arith.negf %195 : vector<2x128xf32>
    %199 = math.exp %198 : vector<2x128xf32>
    %cst_35 = arith.constant 1.000000e+00 : f32
    %200 = vector.broadcast %cst_35 : f32 to vector<2x128xf32>
    %201 = arith.addf %200, %199 : vector<2x128xf32>
    %202 = arith.divf %200, %201 : vector<2x128xf32>
    %203 = arith.negf %197 : vector<2x128xf32>
    %204 = math.exp %203 : vector<2x128xf32>
    %cst_36 = arith.constant 1.000000e+00 : f32
    %205 = vector.broadcast %cst_36 : f32 to vector<2x128xf32>
    %206 = arith.addf %205, %204 : vector<2x128xf32>
    %207 = arith.divf %205, %206 : vector<2x128xf32>
    %208 = vector.extract_strided_slice %202 {offsets = [0, 32], sizes = [2, 32], strides = [1, 1]} : vector<2x128xf32> to vector<2x32xf32>
    %209 = arith.mulf %208, %178 : vector<2x32xf32>
    %210 = vector.extract_strided_slice %202 {offsets = [0, 0], sizes = [2, 32], strides = [1, 1]} : vector<2x128xf32> to vector<2x32xf32>
    %211 = vector.extract_strided_slice %195 {offsets = [0, 64], sizes = [2, 32], strides = [1, 1]} : vector<2x128xf32> to vector<2x32xf32>
    %212 = math.tanh %211 : vector<2x32xf32>
    %213 = arith.mulf %210, %212 : vector<2x32xf32>
    %214 = arith.addf %209, %213 : vector<2x32xf32>
    %215 = vector.extract_strided_slice %207 {offsets = [0, 32], sizes = [2, 32], strides = [1, 1]} : vector<2x128xf32> to vector<2x32xf32>
    %216 = arith.mulf %215, %185 : vector<2x32xf32>
    %217 = vector.extract_strided_slice %207 {offsets = [0, 0], sizes = [2, 32], strides = [1, 1]} : vector<2x128xf32> to vector<2x32xf32>
    %218 = vector.extract_strided_slice %197 {offsets = [0, 64], sizes = [2, 32], strides = [1, 1]} : vector<2x128xf32> to vector<2x32xf32>
    %219 = math.tanh %218 : vector<2x32xf32>
    %220 = arith.mulf %217, %219 : vector<2x32xf32>
    %221 = arith.addf %216, %220 : vector<2x32xf32>
    %222 = vector.extract_strided_slice %202 {offsets = [0, 96], sizes = [2, 32], strides = [1, 1]} : vector<2x128xf32> to vector<2x32xf32>
    %223 = math.tanh %214 : vector<2x32xf32>
    %224 = arith.mulf %222, %223 : vector<2x32xf32>
    %225 = vector.extract_strided_slice %207 {offsets = [0, 96], sizes = [2, 32], strides = [1, 1]} : vector<2x128xf32> to vector<2x32xf32>
    %226 = math.tanh %221 : vector<2x32xf32>
    %227 = arith.mulf %225, %226 : vector<2x32xf32>
    %228 = vector.extract_strided_slice %5 {offsets = [12, 0], sizes = [2, 128], strides = [1, 1]} : vector<16x256xf32> to vector<2x128xf32>
    %229 = vector.extract_strided_slice %5 {offsets = [2, 128], sizes = [2, 128], strides = [1, 1]} : vector<16x256xf32> to vector<2x128xf32>
    %cst_37 = arith.constant dense<0.000000e+00> : vector<2x128xf32>
    %230 = tpu.matmul %224, %6, %cst_37 {dimension_numbers = #tpu.dot_dimension_numbers<[1], [0], [0], [1], [0, 0, 1, 1], [], []>} : vector<2x32xf32>, vector<32x128xf32>, vector<2x128xf32> -> vector<2x128xf32>
    %231 = arith.addf %228, %230 : vector<2x128xf32>
    %cst_38 = arith.constant dense<0.000000e+00> : vector<2x128xf32>
    %232 = tpu.matmul %227, %7, %cst_38 {dimension_numbers = #tpu.dot_dimension_numbers<[1], [0], [0], [1], [0, 0, 1, 1], [], []>} : vector<2x32xf32>, vector<32x128xf32>, vector<2x128xf32> -> vector<2x128xf32>
    %233 = arith.addf %229, %232 : vector<2x128xf32>
    %234 = arith.negf %231 : vector<2x128xf32>
    %235 = math.exp %234 : vector<2x128xf32>
    %cst_39 = arith.constant 1.000000e+00 : f32
    %236 = vector.broadcast %cst_39 : f32 to vector<2x128xf32>
    %237 = arith.addf %236, %235 : vector<2x128xf32>
    %238 = arith.divf %236, %237 : vector<2x128xf32>
    %239 = arith.negf %233 : vector<2x128xf32>
    %240 = math.exp %239 : vector<2x128xf32>
    %cst_40 = arith.constant 1.000000e+00 : f32
    %241 = vector.broadcast %cst_40 : f32 to vector<2x128xf32>
    %242 = arith.addf %241, %240 : vector<2x128xf32>
    %243 = arith.divf %241, %242 : vector<2x128xf32>
    %244 = vector.extract_strided_slice %238 {offsets = [0, 32], sizes = [2, 32], strides = [1, 1]} : vector<2x128xf32> to vector<2x32xf32>
    %245 = arith.mulf %244, %214 : vector<2x32xf32>
    %246 = vector.extract_strided_slice %238 {offsets = [0, 0], sizes = [2, 32], strides = [1, 1]} : vector<2x128xf32> to vector<2x32xf32>
    %247 = vector.extract_strided_slice %231 {offsets = [0, 64], sizes = [2, 32], strides = [1, 1]} : vector<2x128xf32> to vector<2x32xf32>
    %248 = math.tanh %247 : vector<2x32xf32>
    %249 = arith.mulf %246, %248 : vector<2x32xf32>
    %250 = arith.addf %245, %249 : vector<2x32xf32>
    %251 = vector.extract_strided_slice %243 {offsets = [0, 32], sizes = [2, 32], strides = [1, 1]} : vector<2x128xf32> to vector<2x32xf32>
    %252 = arith.mulf %251, %221 : vector<2x32xf32>
    %253 = vector.extract_strided_slice %243 {offsets = [0, 0], sizes = [2, 32], strides = [1, 1]} : vector<2x128xf32> to vector<2x32xf32>
    %254 = vector.extract_strided_slice %233 {offsets = [0, 64], sizes = [2, 32], strides = [1, 1]} : vector<2x128xf32> to vector<2x32xf32>
    %255 = math.tanh %254 : vector<2x32xf32>
    %256 = arith.mulf %253, %255 : vector<2x32xf32>
    %257 = arith.addf %252, %256 : vector<2x32xf32>
    %258 = vector.extract_strided_slice %238 {offsets = [0, 96], sizes = [2, 32], strides = [1, 1]} : vector<2x128xf32> to vector<2x32xf32>
    %259 = math.tanh %250 : vector<2x32xf32>
    %260 = arith.mulf %258, %259 : vector<2x32xf32>
    %261 = vector.extract_strided_slice %243 {offsets = [0, 96], sizes = [2, 32], strides = [1, 1]} : vector<2x128xf32> to vector<2x32xf32>
    %262 = math.tanh %257 : vector<2x32xf32>
    %263 = arith.mulf %261, %262 : vector<2x32xf32>
    %264 = vector.extract_strided_slice %5 {offsets = [14, 0], sizes = [2, 128], strides = [1, 1]} : vector<16x256xf32> to vector<2x128xf32>
    %265 = vector.extract_strided_slice %5 {offsets = [0, 128], sizes = [2, 128], strides = [1, 1]} : vector<16x256xf32> to vector<2x128xf32>
    %cst_41 = arith.constant dense<0.000000e+00> : vector<2x128xf32>
    %266 = tpu.matmul %260, %6, %cst_41 {dimension_numbers = #tpu.dot_dimension_numbers<[1], [0], [0], [1], [0, 0, 1, 1], [], []>} : vector<2x32xf32>, vector<32x128xf32>, vector<2x128xf32> -> vector<2x128xf32>
    %267 = arith.addf %264, %266 : vector<2x128xf32>
    %cst_42 = arith.constant dense<0.000000e+00> : vector<2x128xf32>
    %268 = tpu.matmul %263, %7, %cst_42 {dimension_numbers = #tpu.dot_dimension_numbers<[1], [0], [0], [1], [0, 0, 1, 1], [], []>} : vector<2x32xf32>, vector<32x128xf32>, vector<2x128xf32> -> vector<2x128xf32>
    %269 = arith.addf %265, %268 : vector<2x128xf32>
    %270 = arith.negf %267 : vector<2x128xf32>
    %271 = math.exp %270 : vector<2x128xf32>
    %cst_43 = arith.constant 1.000000e+00 : f32
    %272 = vector.broadcast %cst_43 : f32 to vector<2x128xf32>
    %273 = arith.addf %272, %271 : vector<2x128xf32>
    %274 = arith.divf %272, %273 : vector<2x128xf32>
    %275 = arith.negf %269 : vector<2x128xf32>
    %276 = math.exp %275 : vector<2x128xf32>
    %cst_44 = arith.constant 1.000000e+00 : f32
    %277 = vector.broadcast %cst_44 : f32 to vector<2x128xf32>
    %278 = arith.addf %277, %276 : vector<2x128xf32>
    %279 = arith.divf %277, %278 : vector<2x128xf32>
    %280 = vector.extract_strided_slice %274 {offsets = [0, 32], sizes = [2, 32], strides = [1, 1]} : vector<2x128xf32> to vector<2x32xf32>
    %281 = arith.mulf %280, %250 : vector<2x32xf32>
    %282 = vector.extract_strided_slice %274 {offsets = [0, 0], sizes = [2, 32], strides = [1, 1]} : vector<2x128xf32> to vector<2x32xf32>
    %283 = vector.extract_strided_slice %267 {offsets = [0, 64], sizes = [2, 32], strides = [1, 1]} : vector<2x128xf32> to vector<2x32xf32>
    %284 = math.tanh %283 : vector<2x32xf32>
    %285 = arith.mulf %282, %284 : vector<2x32xf32>
    %286 = arith.addf %281, %285 : vector<2x32xf32>
    %287 = vector.extract_strided_slice %279 {offsets = [0, 32], sizes = [2, 32], strides = [1, 1]} : vector<2x128xf32> to vector<2x32xf32>
    %288 = arith.mulf %287, %257 : vector<2x32xf32>
    %289 = vector.extract_strided_slice %279 {offsets = [0, 0], sizes = [2, 32], strides = [1, 1]} : vector<2x128xf32> to vector<2x32xf32>
    %290 = vector.extract_strided_slice %269 {offsets = [0, 64], sizes = [2, 32], strides = [1, 1]} : vector<2x128xf32> to vector<2x32xf32>
    %291 = math.tanh %290 : vector<2x32xf32>
    %292 = arith.mulf %289, %291 : vector<2x32xf32>
    %293 = arith.addf %288, %292 : vector<2x32xf32>
    %294 = vector.extract_strided_slice %274 {offsets = [0, 96], sizes = [2, 32], strides = [1, 1]} : vector<2x128xf32> to vector<2x32xf32>
    %295 = math.tanh %286 : vector<2x32xf32>
    %296 = arith.mulf %294, %295 : vector<2x32xf32>
    %297 = vector.extract_strided_slice %279 {offsets = [0, 96], sizes = [2, 32], strides = [1, 1]} : vector<2x128xf32> to vector<2x32xf32>
    %298 = math.tanh %293 : vector<2x32xf32>
    %299 = arith.mulf %297, %298 : vector<2x32xf32>
    %300 = arith.addf %44, %299 : vector<2x32xf32>
    %301 = arith.addf %80, %263 : vector<2x32xf32>
    %302 = arith.addf %116, %227 : vector<2x32xf32>
    %303 = arith.addf %152, %191 : vector<2x32xf32>
    %304 = arith.addf %188, %155 : vector<2x32xf32>
    %305 = arith.addf %224, %119 : vector<2x32xf32>
    %306 = arith.addf %260, %83 : vector<2x32xf32>
    %307 = arith.addf %296, %47 : vector<2x32xf32>
    %308 = tpu.concatenate %300, %301, %302, %303, %304, %305, %306, %307 in 0 : vector<2x32xf32>, vector<2x32xf32>, vector<2x32xf32>, vector<2x32xf32>, vector<2x32xf32>, vector<2x32xf32>, vector<2x32xf32>, vector<2x32xf32> -> vector<16x32xf32>
    %c0_45 = arith.constant 0 : index
    %c0_46 = arith.constant 0 : index
    %309 = vector.load %arg5[%c0_45, %c0_46] : memref<32x24xf32, #tpu.memory_space<vmem>>, vector<32x24xf32>
    %cst_47 = arith.constant dense<0.000000e+00> : vector<16x24xf32>
    %310 = tpu.matmul %308, %309, %cst_47 {dimension_numbers = #tpu.dot_dimension_numbers<[1], [0], [0], [1], [0, 0, 1, 1], [], []>} : vector<16x32xf32>, vector<32x24xf32>, vector<16x24xf32> -> vector<16x24xf32>
    %c0_48 = arith.constant 0 : index
    %c0_49 = arith.constant 0 : index
    %311 = vector.load %arg6[%c0_48, %c0_49] : memref<1x24xf32, #tpu.memory_space<vmem>>, vector<1x24xf32>
    %312 = vector.broadcast %311 : vector<1x24xf32> to vector<16x24xf32>
    %313 = arith.addf %310, %312 : vector<16x24xf32>
    %cst_50 = arith.constant 0.000000e+00 : f32
    %314 = vector.broadcast %cst_50 : f32 to vector<16x24xf32>
    %315 = arith.maximumf %313, %314 : vector<16x24xf32>
    %c0_51 = arith.constant 0 : index
    %c0_52 = arith.constant 0 : index
    %316 = vector.load %arg7[%c0_51, %c0_52] : memref<1x24xf32, #tpu.memory_space<vmem>>, vector<1x24xf32>
    %317 = vector.broadcast %316 : vector<1x24xf32> to vector<16x24xf32>
    %318 = arith.mulf %315, %317 : vector<16x24xf32>
    %cst_53 = arith.constant dense<0.000000e+00> : vector<16xf32>
    %319 = vector.multi_reduction <add>, %318, %cst_53 [1] : vector<16x24xf32> to vector<16xf32>
    %320 = vector.shape_cast %319 : vector<16xf32> to vector<16x1xf32>
    %c0_54 = arith.constant 0 : index
    %c0_55 = arith.constant 0 : index
    %321 = vector.load %arg8[%c0_54, %c0_55] : memref<1x1xf32, #tpu.memory_space<vmem>>, vector<1x1xf32>
    %322 = vector.broadcast %321 : vector<1x1xf32> to vector<16x1xf32>
    %323 = arith.addf %320, %322 : vector<16x1xf32>
    %324 = vector.extract_strided_slice %323 {offsets = [0, 0], sizes = [2, 1], strides = [1, 1]} : vector<16x1xf32> to vector<2x1xf32>
    %325 = vector.extract_strided_slice %323 {offsets = [2, 0], sizes = [2, 1], strides = [1, 1]} : vector<16x1xf32> to vector<2x1xf32>
    %326 = vector.extract_strided_slice %323 {offsets = [4, 0], sizes = [2, 1], strides = [1, 1]} : vector<16x1xf32> to vector<2x1xf32>
    %327 = vector.extract_strided_slice %323 {offsets = [6, 0], sizes = [2, 1], strides = [1, 1]} : vector<16x1xf32> to vector<2x1xf32>
    %328 = vector.extract_strided_slice %323 {offsets = [8, 0], sizes = [2, 1], strides = [1, 1]} : vector<16x1xf32> to vector<2x1xf32>
    %329 = vector.extract_strided_slice %323 {offsets = [10, 0], sizes = [2, 1], strides = [1, 1]} : vector<16x1xf32> to vector<2x1xf32>
    %330 = vector.extract_strided_slice %323 {offsets = [12, 0], sizes = [2, 1], strides = [1, 1]} : vector<16x1xf32> to vector<2x1xf32>
    %331 = vector.extract_strided_slice %323 {offsets = [14, 0], sizes = [2, 1], strides = [1, 1]} : vector<16x1xf32> to vector<2x1xf32>
    %332 = tpu.concatenate %324, %325, %326, %327, %328, %329, %330, %331 in 1 : vector<2x1xf32>, vector<2x1xf32>, vector<2x1xf32>, vector<2x1xf32>, vector<2x1xf32>, vector<2x1xf32>, vector<2x1xf32>, vector<2x1xf32> -> vector<2x8xf32>
    %cst_56 = arith.constant dense<0xFF800000> : vector<2xf32>
    %333 = vector.multi_reduction <maximumf>, %332, %cst_56 [1] : vector<2x8xf32> to vector<2xf32>
    %334 = vector.shape_cast %333 : vector<2xf32> to vector<2x1xf32>
    %335 = vector.broadcast %334 : vector<2x1xf32> to vector<2x8xf32>
    %336 = arith.subf %332, %335 : vector<2x8xf32>
    %337 = math.exp %336 : vector<2x8xf32>
    %cst_57 = arith.constant dense<0.000000e+00> : vector<2xf32>
    %338 = vector.multi_reduction <add>, %337, %cst_57 [1] : vector<2x8xf32> to vector<2xf32>
    %339 = vector.shape_cast %338 : vector<2xf32> to vector<2x1xf32>
    %340 = tpu.reciprocal %339 {approx = true} : vector<2x1xf32> -> vector<2x1xf32>
    %341 = arith.mulf %339, %340 : vector<2x1xf32>
    %cst_58 = arith.constant 2.000000e+00 : f32
    %342 = vector.broadcast %cst_58 : f32 to vector<2x1xf32>
    %343 = arith.subf %342, %341 : vector<2x1xf32>
    %344 = arith.mulf %340, %343 : vector<2x1xf32>
    %345 = vector.broadcast %344 : vector<2x1xf32> to vector<2x8xf32>
    %346 = arith.mulf %337, %345 : vector<2x8xf32>
    %c0_59 = arith.constant 0 : index
    %c0_60 = arith.constant 0 : index
    %347 = vector.load %arg12[%c0_59, %c0_60] : memref<2x8xf32, #tpu.memory_space<vmem>>, vector<2x8xf32>
    tpu.vector_store %arg12[%c0_59, %c0_60], %346 {strides = array<i32>} : memref<2x8xf32, #tpu.memory_space<vmem>>, vector<2x8xf32>,
    %348 = vector.extract_strided_slice %346 {offsets = [0, 0], sizes = [2, 1], strides = [1, 1]} : vector<2x8xf32> to vector<2x1xf32>
    %349 = vector.broadcast %348 : vector<2x1xf32> to vector<2x32xf32>
    %350 = arith.mulf %349, %300 : vector<2x32xf32>
    %351 = vector.extract_strided_slice %346 {offsets = [0, 1], sizes = [2, 1], strides = [1, 1]} : vector<2x8xf32> to vector<2x1xf32>
    %352 = vector.broadcast %351 : vector<2x1xf32> to vector<2x32xf32>
    %353 = arith.mulf %352, %301 : vector<2x32xf32>
    %354 = arith.addf %350, %353 : vector<2x32xf32>
    %355 = vector.extract_strided_slice %346 {offsets = [0, 2], sizes = [2, 1], strides = [1, 1]} : vector<2x8xf32> to vector<2x1xf32>
    %356 = vector.broadcast %355 : vector<2x1xf32> to vector<2x32xf32>
    %357 = arith.mulf %356, %302 : vector<2x32xf32>
    %358 = arith.addf %354, %357 : vector<2x32xf32>
    %359 = vector.extract_strided_slice %346 {offsets = [0, 3], sizes = [2, 1], strides = [1, 1]} : vector<2x8xf32> to vector<2x1xf32>
    %360 = vector.broadcast %359 : vector<2x1xf32> to vector<2x32xf32>
    %361 = arith.mulf %360, %303 : vector<2x32xf32>
    %362 = arith.addf %358, %361 : vector<2x32xf32>
    %363 = vector.extract_strided_slice %346 {offsets = [0, 4], sizes = [2, 1], strides = [1, 1]} : vector<2x8xf32> to vector<2x1xf32>
    %364 = vector.broadcast %363 : vector<2x1xf32> to vector<2x32xf32>
    %365 = arith.mulf %364, %304 : vector<2x32xf32>
    %366 = arith.addf %362, %365 : vector<2x32xf32>
    %367 = vector.extract_strided_slice %346 {offsets = [0, 5], sizes = [2, 1], strides = [1, 1]} : vector<2x8xf32> to vector<2x1xf32>
    %368 = vector.broadcast %367 : vector<2x1xf32> to vector<2x32xf32>
    %369 = arith.mulf %368, %305 : vector<2x32xf32>
    %370 = arith.addf %366, %369 : vector<2x32xf32>
    %371 = vector.extract_strided_slice %346 {offsets = [0, 6], sizes = [2, 1], strides = [1, 1]} : vector<2x8xf32> to vector<2x1xf32>
    %372 = vector.broadcast %371 : vector<2x1xf32> to vector<2x32xf32>
    %373 = arith.mulf %372, %306 : vector<2x32xf32>
    %374 = arith.addf %370, %373 : vector<2x32xf32>
    %375 = vector.extract_strided_slice %346 {offsets = [0, 7], sizes = [2, 1], strides = [1, 1]} : vector<2x8xf32> to vector<2x1xf32>
    %376 = vector.broadcast %375 : vector<2x1xf32> to vector<2x32xf32>
    %377 = arith.mulf %376, %307 : vector<2x32xf32>
    %378 = arith.addf %374, %377 : vector<2x32xf32>
    %c0_61 = arith.constant 0 : index
    %c0_62 = arith.constant 0 : index
    %379 = vector.load %arg9[%c0_61, %c0_62] : memref<32x4xf32, #tpu.memory_space<vmem>>, vector<32x4xf32>
    %cst_63 = arith.constant dense<0.000000e+00> : vector<2x4xf32>
    %380 = tpu.matmul %378, %379, %cst_63 {dimension_numbers = #tpu.dot_dimension_numbers<[1], [0], [0], [1], [0, 0, 1, 1], [], []>} : vector<2x32xf32>, vector<32x4xf32>, vector<2x4xf32> -> vector<2x4xf32>
    %c0_64 = arith.constant 0 : index
    %c0_65 = arith.constant 0 : index
    %381 = vector.load %arg10[%c0_64, %c0_65] : memref<1x4xf32, #tpu.memory_space<vmem>>, vector<1x4xf32>
    %382 = vector.broadcast %381 : vector<1x4xf32> to vector<2x4xf32>
    %383 = arith.addf %380, %382 : vector<2x4xf32>
    %c0_66 = arith.constant 0 : index
    %c0_67 = arith.constant 0 : index
    %384 = vector.load %arg11[%c0_66, %c0_67] : memref<2x4xf32, #tpu.memory_space<vmem>>, vector<2x4xf32>
    tpu.vector_store %arg11[%c0_66, %c0_67], %383 {strides = array<i32>} : memref<2x4xf32, #tpu.memory_space<vmem>>, vector<2x4xf32>,
    return
  }
}

</mosaic_0001>

<llo_original>
// kernel: rnn_attn_cls_forward.1
$region0: #{rnn_attn_cls_forward.1}
  #allocation0 [shape = 'u32[]', space=smem, size = 0x4, offset = 0x4, fixed_abs, tag = 'smem constant byte address 0x4 - core index']
  #allocation1 [shape = 'u32[144,128]{1,0:T(1,128)}', space=vmem, size = 0x12000, scoped, tag = 'internal scratch']
  #allocation2 [shape = 'f32[1,1]{1,0:T(1,128)S(1)}', space=vmem, size = 0x200, scoped, tag = 'scoped memory for rnn_attn_cls_forward.1']
  %s0 = inlined_call_operand.vmem [shape: f32[16,32], index: 0, kind: input, shape index: {}]
  %s1 = inlined_call_operand.vmem [shape: f32[32,256], index: 1, kind: input, shape index: {}]
  %s2 = inlined_call_operand.vmem [shape: f32[1,256], index: 2, kind: input, shape index: {}]
  %s3 = inlined_call_operand.vmem [shape: f32[32,128], index: 3, kind: input, shape index: {}]
  %s4 = inlined_call_operand.vmem [shape: f32[32,128], index: 4, kind: input, shape index: {}]
  %s5 = inlined_call_operand.vmem [shape: f32[32,24], index: 5, kind: input, shape index: {}]
  %s6 = inlined_call_operand.vmem [shape: f32[1,24], index: 6, kind: input, shape index: {}]
  %s7 = inlined_call_operand.vmem [shape: f32[1,24], index: 7, kind: input, shape index: {}]
  %s8 = inlined_call_operand.<no memory space> [shape: f32[1,1], index: 8, kind: input, shape index: {}]
  %s9 = inlined_call_operand.vmem [shape: f32[32,4], index: 9, kind: input, shape index: {}]
  %s10 = inlined_call_operand.vmem [shape: f32[1,4], index: 10, kind: input, shape index: {}]
  %s11 = inlined_call_operand.hbm [shape: f32[2,4], index: 11, kind: output, shape index: {0}]
  %s12 = inlined_call_operand.hbm [shape: f32[2,8], index: 12, kind: output, shape index: {1}]
  %13 = xla_tuple %s11, %s12
  %s14 = sld [smem:[#allocation0]]
  $region62: #{rnn_attn_cls_forward.1} parent=0
    _
  %s16 = ssub.s32 1, %s14
  %s17 = scalar_select 0, %s16, %s14
  %v18 = vstv %s8
  %19 = vst [vmem:[#allocation2] sm:$0x1] %v18
  $region1: #{rnn_attn_cls_forward.1} parent=0
    #allocation3 [shape = 'u8[1024]{0}', space=vmem, size = 0x400, scoped, tag = 'output window, operand 0, single buffered']
    #allocation4 [shape = 's32[1]{0}', space=sflag, size = 0x4, scoped, tag = 'scoped memory for rnn_attn_cls_forward.1']
    #allocation5 [shape = 'u8[1024]{0}', space=vmem, size = 0x400, scoped, tag = 'output window, operand 1, single buffered']
    #allocation6 [shape = 's32[1]{0}', space=sflag, size = 0x4, scoped, tag = 'scoped memory for rnn_attn_cls_forward.1']
    %20 = vsyncpa [#allocation4], 0
    %21 = vsyncpa [#allocation6], 0
    // Predicated region
    $region2: #{rnn_attn_cls_forward.1} parent=1 // pred_check
      _
    $region3: #{rnn_attn_cls_forward.1} parent=1 // pred_check_branch
      %23 = sbr.rel (0) target = $region5
    $region4: #{rnn_attn_cls_forward.1} parent=1 // pred_region
      _
    $region5: #{rnn_attn_cls_forward.1} parent=1 // pred_fallthru
      _
    // Predicated region
    $region6: #{rnn_attn_cls_forward.1} parent=1 // pred_check
      _
    $region7: #{rnn_attn_cls_forward.1} parent=1 // pred_check_branch
      %25 = sbr.rel (0) target = $region9
    $region8: #{rnn_attn_cls_forward.1} parent=1 // pred_region
      _
    $region9: #{rnn_attn_cls_forward.1} parent=1 // pred_fallthru
      _
    // Predicated region
    $region10: #{rnn_attn_cls_forward.1} parent=1 // pred_check
      _
    $region11: #{rnn_attn_cls_forward.1} parent=1 // pred_check_branch
      %27 = sbr.rel (0) target = $region13
    $region12: #{rnn_attn_cls_forward.1} parent=1 // pred_region
      _
    $region13: #{rnn_attn_cls_forward.1} parent=1 // pred_fallthru
      _
    // Predicated region
    $region14: #{rnn_attn_cls_forward.1} parent=1 // pred_check
      _
    $region15: #{rnn_attn_cls_forward.1} parent=1 // pred_check_branch
      %29 = sbr.rel (0) target = $region17
    $region16: #{rnn_attn_cls_forward.1} parent=1 // pred_region
      _
    $region17: #{rnn_attn_cls_forward.1} parent=1 // pred_fallthru
      _
    // Predicated region
    $region18: #{rnn_attn_cls_forward.1} parent=1 // pred_check
      _
    $region19: #{rnn_attn_cls_forward.1} parent=1 // pred_check_branch
      %31 = sbr.rel (0) target = $region21
    $region20: #{rnn_attn_cls_forward.1} parent=1 // pred_region
      _
    $region21: #{rnn_attn_cls_forward.1} parent=1 // pred_fallthru
      _
    // Predicated region
    $region22: #{rnn_attn_cls_forward.1} parent=1 // pred_check
      _
    $region23: #{rnn_attn_cls_forward.1} parent=1 // pred_check_branch
      %33 = sbr.rel (0) target = $region25
    $region24: #{rnn_attn_cls_forward.1} parent=1 // pred_region
      _
    $region25: #{rnn_attn_cls_forward.1} parent=1 // pred_fallthru
      _
    // Predicated region
    $region26: #{rnn_attn_cls_forward.1} parent=1 // pred_check
      _
    $region27: #{rnn_attn_cls_forward.1} parent=1 // pred_check_branch
      %35 = sbr.rel (0) target = $region29
    $region28: #{rnn_attn_cls_forward.1} parent=1 // pred_region
      _
    $region29: #{rnn_attn_cls_forward.1} parent=1 // pred_fallthru
      _
    // Predicated region
    $region30: #{rnn_attn_cls_forward.1} parent=1 // pred_check
      _
    $region31: #{rnn_attn_cls_forward.1} parent=1 // pred_check_branch
      %37 = sbr.rel (0) target = $region33
    $region32: #{rnn_attn_cls_forward.1} parent=1 // pred_region
      _
    $region33: #{rnn_attn_cls_forward.1} parent=1 // pred_fallthru
      _
    // Predicated region
    $region34: #{rnn_attn_cls_forward.1} parent=1 // pred_check
      _
    $region35: #{rnn_attn_cls_forward.1} parent=1 // pred_check_branch
      %39 = sbr.rel (0) target = $region37
    $region36: #{rnn_attn_cls_forward.1} parent=1 // pred_region
      _
    $region37: #{rnn_attn_cls_forward.1} parent=1 // pred_fallthru
      _
    // Predicated region
    $region38: #{rnn_attn_cls_forward.1} parent=1 // pred_check
      _
    $region39: #{rnn_attn_cls_forward.1} parent=1 // pred_check_branch
      %41 = sbr.rel (0) target = $region41
    $region40: #{rnn_attn_cls_forward.1} parent=1 // pred_region
      _
    $region41: #{rnn_attn_cls_forward.1} parent=1 // pred_fallthru
      _
    // Predicated region
    $region42: #{rnn_attn_cls_forward.1} parent=1 // pred_check
      _
    $region43: #{rnn_attn_cls_forward.1} parent=1 // pred_check_branch
      %43 = sbr.rel (0) target = $region45
    $region44: #{rnn_attn_cls_forward.1} parent=1 // pred_region
      _
    $region45: #{rnn_attn_cls_forward.1} parent=1 // pred_fallthru
      _
    %v44 = vld [vmem:[%s0] sm:$0xff]
    %v45 = vld [vmem:[%s0 + $0x8] sm:$0xff]
    %v46 = vld [vmem:[%s1] sm:$0xff]
    %v47 = vld [vmem:[%s1 + $0x8] sm:$0xff]
    %v48 = vld [vmem:[%s1 + $0x10] sm:$0xff]
    %v49 = vld [vmem:[%s1 + $0x18] sm:$0xff]
    %v50 = vld [vmem:[%s1 + $0x20] sm:$0xff]
    %v51 = vld [vmem:[%s1 + $0x28] sm:$0xff]
    %v52 = vld [vmem:[%s1 + $0x30] sm:$0xff]
    %v53 = vld [vmem:[%s1 + $0x38] sm:$0xff]
    %v54 = vld [vmem:[%s2] sm:$0x3]
    %v56 = vlaneseq
    %v57 = vshrl.u32 %v56, 7
    %v58 = vsub.s32 0, %v57
    %v59 = vrot.slane %v54, %v58
    %v60 = vlaneseq
    %v61 = vshrl.u32 %v60, 7
    %v62 = vsub.s32 1, %v61
    %v63 = vrot.slane %v54, %v62
    %vm66 = vcmask 261120
    %v68 = vsel %vm66, %v44, 0
    %v71 = vsel %vm66, %v45, 0
    %73 = vmatprep.subr.mxu0 0.0
    %74 = vmatpush1.msra.mxu0 0.0
    %75 = vmatprep.subr.mxu0 0.0
    %76 = vmatpush1.msra.mxu0 0.0
    %77 = vmatprep.subr.mxu0 0.0
    %78 = vmatpush1.msra.mxu0 0.0
    %79 = vmatprep.subr.mxu0 0.0
    %80 = vmatpush1.msra.mxu0 0.0
    %81 = vmatprep.subr.mxu0 0.0
    %82 = vmatpush1.msra.mxu0 0.0
    %83 = vmatprep.subr.mxu0 0.0
    %84 = vmatpush1.msra.mxu0 0.0
    %85 = vmatprep.subr.mxu0 0.0
    %86 = vmatpush1.msra.mxu0 0.0
    %87 = vmatprep.subr.mxu0 0.0
    %88 = vmatpush1.msra.mxu0 0.0
    %89 = vmatprep.subr.mxu0 0.0
    %90 = vmatpush1.msra.mxu0 0.0
    %91 = vmatprep.subr.mxu0 0.0
    %92 = vmatpush1.msra.mxu0 0.0
    %93 = vmatprep.subr.mxu0 0.0
    %94 = vmatpush1.msra.mxu0 0.0
    %95 = vmatprep.subr.mxu0 0.0
    %96 = vmatpush1.msra.mxu0 0.0
    %97 = vmatprep.subr.mxu0 %v53
    %98 = vmatpush1.msra.mxu0 %v52
    %99 = vmatprep.subr.mxu0 %v51
    %100 = vmatpush1.msra.mxu0 %v50
    %101 = vmatprep.subr.mxu0 %v49
    %102 = vmatpush1.msra.mxu0 %v48
    %103 = vmatprep.subr.mxu0 %v47
    %104 = vmatpush1.msra.mxu0 %v46
    %105 = vmatprep.subr.mxu0 0.0
    %106 = vmatpush2.msra.mxu0 0.0
    %107 = vmatprep.subr.mxu0 0.0
    %108 = vmatpush2.msra.mxu0 0.0
    %109 = vmatprep.subr.mxu0 0.0
    %110 = vmatpush2.msra.mxu0 0.0
    %111 = vmatprep.subr.mxu0 0.0
    %112 = vmatpush2.msra.mxu0 0.0
    %113 = vmatprep.subr.mxu0 0.0
    %114 = vmatpush2.msra.mxu0 0.0
    %115 = vmatprep.subr.mxu0 0.0
    %116 = vmatpush2.msra.mxu0 0.0
    %117 = vmatprep.subr.mxu0 0.0
    %118 = vmatpush2.msra.mxu0 0.0
    %119 = vmatprep.subr.mxu0 0.0
    %120 = vmatpush2.msra.mxu0 0.0
    %121 = vmatprep.subr.mxu0 0.0
    %122 = vmatpush2.msra.mxu0 0.0
    %123 = vmatprep.subr.mxu0 0.0
    %124 = vmatpush2.msra.mxu0 0.0
    %125 = vmatprep.subr.mxu0 0.0
    %126 = vmatpush2.msra.mxu0 0.0
    %127 = vmatprep.subr.mxu0 0.0
    %128 = vmatpush2.msra.mxu0 0.0
    %129 = vmatprep.subr.mxu0 0.0
    %130 = vmatpush2.msra.mxu0 0.0
    %131 = vmatprep.subr.mxu0 0.0
    %132 = vmatpush2.msra.mxu0 0.0
    %133 = vmatprep.subr.mxu0 0.0
    %134 = vmatpush2.msra.mxu0 0.0
    %135 = vmatprep.subr.mxu0 0.0
    %136 = vmatpush2.msra.mxu0 0.0
    %137 = vmatprep.mubr.f32.mxu0 0.0
    %138 = vmatmul.mubr.f32.gmra.mxu0 %v68
    %v139 = vpop.f32.mrf.mxu0
    %v140 = vadd.f32 %v59, %v139
    %v141 = vpop.f32.mrf.mxu0
    %v142 = vadd.f32 %v63, %v141
    %143 = vmatprep.mubr.f32.mxu0 0.0
    %144 = vmatmul.mubr.f32.gmra.mxu0 %v71
    %v145 = vpop.f32.mrf.mxu0
    %v146 = vadd.f32 %v59, %v145
    %v147 = vpop.f32.mrf.mxu0
    %v148 = vadd.f32 %v63, %v147
    %149 = vdwg.mxu0
    %v150 = vld [vmem:[%s3] sm:$0xff]
    %v151 = vld [vmem:[%s3 + $0x8] sm:$0xff]
    %v152 = vld [vmem:[%s3 + $0x10] sm:$0xff]
    %v153 = vld [vmem:[%s3 + $0x18] sm:$0xff]
    %v154 = vld [vmem:[%s4] sm:$0xff]
    %v155 = vld [vmem:[%s4 + $0x8] sm:$0xff]
    %v156 = vld [vmem:[%s4 + $0x10] sm:$0xff]
    %v157 = vld [vmem:[%s4 + $0x18] sm:$0xff]
    %v159 = vsel %vm66, 0.0, 0
    %161 = vmatprep.subr.mxu0 0.0
    %162 = vmatpush1.msra.mxu0 0.0
    %163 = vmatprep.subr.mxu0 0.0
    %164 = vmatpush1.msra.mxu0 0.0
    %165 = vmatprep.subr.mxu0 0.0
    %166 = vmatpush1.msra.mxu0 0.0
    %167 = vmatprep.subr.mxu0 0.0
    %168 = vmatpush1.msra.mxu0 0.0
    %169 = vmatprep.subr.mxu0 0.0
    %170 = vmatpush1.msra.mxu0 0.0
    %171 = vmatprep.subr.mxu0 0.0
    %172 = vmatpush1.msra.mxu0 0.0
    %173 = vmatprep.subr.mxu0 0.0
    %174 = vmatpush1.msra.mxu0 0.0
    %175 = vmatprep.subr.mxu0 0.0
    %176 = vmatpush1.msra.mxu0 0.0
    %177 = vmatprep.subr.mxu0 0.0
    %178 = vmatpush1.msra.mxu0 0.0
    %179 = vmatprep.subr.mxu0 0.0
    %180 = vmatpush1.msra.mxu0 0.0
    %181 = vmatprep.subr.mxu0 0.0
    %182 = vmatpush1.msra.mxu0 0.0
    %183 = vmatprep.subr.mxu0 0.0
    %184 = vmatpush1.msra.mxu0 0.0
    %185 = vmatprep.subr.mxu0 0.0
    %186 = vmatpush1.msra.mxu0 %v153
    %187 = vmatprep.subr.mxu0 0.0
    %188 = vmatpush1.msra.mxu0 %v152
    %189 = vmatprep.subr.mxu0 0.0
    %190 = vmatpush1.msra.mxu0 %v151
    %191 = vmatprep.subr.mxu0 0.0
    %192 = vmatpush1.msra.mxu0 %v150
    %193 = vmatprep.subr.mxu0 0.0
    %194 = vmatpush2.msra.mxu0 0.0
    %195 = vmatprep.subr.mxu0 0.0
    %196 = vmatpush2.msra.mxu0 0.0
    %197 = vmatprep.subr.mxu0 0.0
    %198 = vmatpush2.msra.mxu0 0.0
    %199 = vmatprep.subr.mxu0 0.0
    %200 = vmatpush2.msra.mxu0 0.0
    %201 = vmatprep.subr.mxu0 0.0
    %202 = vmatpush2.msra.mxu0 0.0
    %203 = vmatprep.subr.mxu0 0.0
    %204 = vmatpush2.msra.mxu0 0.0
    %205 = vmatprep.subr.mxu0 0.0
    %206 = vmatpush2.msra.mxu0 0.0
    %207 = vmatprep.subr.mxu0 0.0
    %208 = vmatpush2.msra.mxu0 0.0
    %209 = vmatprep.subr.mxu0 0.0
    %210 = vmatpush2.msra.mxu0 0.0
    %211 = vmatprep.subr.mxu0 0.0
    %212 = vmatpush2.msra.mxu0 0.0
    %213 = vmatprep.subr.mxu0 0.0
    %214 = vmatpush2.msra.mxu0 0.0
    %215 = vmatprep.subr.mxu0 0.0
    %216 = vmatpush2.msra.mxu0 0.0
    %217 = vmatprep.subr.mxu0 0.0
    %218 = vmatpush2.msra.mxu0 0.0
    %219 = vmatprep.subr.mxu0 0.0
    %220 = vmatpush2.msra.mxu0 0.0
    %221 = vmatprep.subr.mxu0 0.0
    %222 = vmatpush2.msra.mxu0 0.0
    %223 = vmatprep.subr.mxu0 0.0
    %224 = vmatpush2.msra.mxu0 0.0
    %225 = vmatprep.mubr.f32.mxu0 0.0
    %226 = vmatmul.mubr.f32.gmra.mxu0 %v159
    %v227 = vpop.f32.mrf.mxu0
    %v228 = vadd.f32 0.0, %v227
    %v229 = vpop.f32.mrf.mxu0
    %230 = vdwg.mxu0
    %v231 = vadd.f32 %v140, %v228
    %232 = vmatprep.subr.mxu0 0.0
    %233 = vmatpush1.msra.mxu0 0.0
    %234 = vmatprep.subr.mxu0 0.0
    %235 = vmatpush1.msra.mxu0 0.0
    %236 = vmatprep.subr.mxu0 0.0
    %237 = vmatpush1.msra.mxu0 0.0
    %238 = vmatprep.subr.mxu0 0.0
    %239 = vmatpush1.msra.mxu0 0.0
    %240 = vmatprep.subr.mxu0 0.0
    %241 = vmatpush1.msra.mxu0 0.0
    %242 = vmatprep.subr.mxu0 0.0
    %243 = vmatpush1.msra.mxu0 0.0
    %244 = vmatprep.subr.mxu0 0.0
    %245 = vmatpush1.msra.mxu0 0.0
    %246 = vmatprep.subr.mxu0 0.0
    %247 = vmatpush1.msra.mxu0 0.0
    %248 = vmatprep.subr.mxu0 0.0
    %249 = vmatpush1.msra.mxu0 0.0
    %250 = vmatprep.subr.mxu0 0.0
    %251 = vmatpush1.msra.mxu0 0.0
    %252 = vmatprep.subr.mxu0 0.0
    %253 = vmatpush1.msra.mxu0 0.0
    %254 = vmatprep.subr.mxu0 0.0
    %255 = vmatpush1.msra.mxu0 0.0
    %256 = vmatprep.subr.mxu0 0.0
    %257 = vmatpush1.msra.mxu0 %v157
    %258 = vmatprep.subr.mxu0 0.0
    %259 = vmatpush1.msra.mxu0 %v156
    %260 = vmatprep.subr.mxu0 0.0
    %261 = vmatpush1.msra.mxu0 %v155
    %262 = vmatprep.subr.mxu0 0.0
    %263 = vmatpush1.msra.mxu0 %v154
    %264 = vmatprep.subr.mxu0 0.0
    %265 = vmatpush2.msra.mxu0 0.0
    %266 = vmatprep.subr.mxu0 0.0
    %267 = vmatpush2.msra.mxu0 0.0
    %268 = vmatprep.subr.mxu0 0.0
    %269 = vmatpush2.msra.mxu0 0.0
    %270 = vmatprep.subr.mxu0 0.0
    %271 = vmatpush2.msra.mxu0 0.0
    %272 = vmatprep.subr.mxu0 0.0
    %273 = vmatpush2.msra.mxu0 0.0
    %274 = vmatprep.subr.mxu0 0.0
    %275 = vmatpush2.msra.mxu0 0.0
    %276 = vmatprep.subr.mxu0 0.0
    %277 = vmatpush2.msra.mxu0 0.0
    %278 = vmatprep.subr.mxu0 0.0
    %279 = vmatpush2.msra.mxu0 0.0
    %280 = vmatprep.subr.mxu0 0.0
    %281 = vmatpush2.msra.mxu0 0.0
    %282 = vmatprep.subr.mxu0 0.0
    %283 = vmatpush2.msra.mxu0 0.0
    %284 = vmatprep.subr.mxu0 0.0
    %285 = vmatpush2.msra.mxu0 0.0
    %286 = vmatprep.subr.mxu0 0.0
    %287 = vmatpush2.msra.mxu0 0.0
    %288 = vmatprep.subr.mxu0 0.0
    %289 = vmatpush2.msra.mxu0 0.0
    %290 = vmatprep.subr.mxu0 0.0
    %291 = vmatpush2.msra.mxu0 0.0
    %292 = vmatprep.subr.mxu0 0.0
    %293 = vmatpush2.msra.mxu0 0.0
    %294 = vmatprep.subr.mxu0 0.0
    %295 = vmatpush2.msra.mxu0 0.0
    %296 = vmatprep.mubr.f32.mxu0 0.0
    %297 = vmatmul.mubr.f32.gmra.mxu0 %v159
    %v298 = vpop.f32.mrf.mxu0
    %v299 = vadd.f32 0.0, %v298
    %v300 = vpop.f32.mrf.mxu0
    %301 = vdwg.mxu0
    %v303 = vrot.slane %v299, 2
    %v305 = vadd.f32 %v148, %v303
    %v306 = vxor.u32 %v231, 2147483648
    %v307 = vmul.f32 %v306, 1.442695
    %v308 = vpow.pop %v307
    %v309 = vadd.f32 %v308, 1.0
    %v310 = vrcp.pop %v309
    %v311 = vmul.f32 1.0, %v310
    %v312 = vxor.u32 %v305, 2147483648
    %v313 = vmul.f32 %v312, 1.442695
    %v314 = vpow.pop %v313
    %v315 = vadd.f32 %v314, 1.0
    %v316 = vrcp.pop %v315
    %v317 = vmul.f32 1.0, %v316
    %v318 = vmul.f32 %v311, 0.0
    %v319 = vtanh.pop %v231
    %321 = vrot.lane.b32.xlu0 %v319, 64
    %v322 = vpop.permute.xlu0 %321
    %v324 = vmul.f32 %v311, %v322
    %326 = vrot.lane.b32.xlu0 %v324, 32
    %v327 = vpop.permute.xlu0 %326
    %v329 = vadd.f32 %v318, %v327
    %v330 = vmul.f32 %v317, 0.0
    %v331 = vtanh.pop %v305
    %333 = vrot.lane.b32.xlu0 %v331, 64
    %v334 = vpop.permute.xlu0 %333
    %v336 = vmul.f32 %v317, %v334
    %338 = vrot.lane.b32.xlu0 %v336, 32
    %v339 = vpop.permute.xlu0 %338
    %v341 = vadd.f32 %v330, %v339
    %v342 = vtanh.pop %v329
    %344 = vrot.lane.b32.xlu0 %v342, 64
    %v345 = vpop.permute.xlu0 %344
    %v347 = vmul.f32 %v311, %v345
    %v348 = vtanh.pop %v341
    %350 = vrot.lane.b32.xlu0 %v348, 64
    %v351 = vpop.permute.xlu0 %350
    %v353 = vmul.f32 %v317, %v351
    %355 = vrot.lane.b32.xlu0 %v347, 32
    %v356 = vpop.permute.xlu0 %355
    %v357 = vsel %vm66, %v356, 0
    %359 = vmatprep.subr.mxu0 0.0
    %360 = vmatpush1.msra.mxu0 0.0
    %361 = vmatprep.subr.mxu0 0.0
    %362 = vmatpush1.msra.mxu0 0.0
    %363 = vmatprep.subr.mxu0 0.0
    %364 = vmatpush1.msra.mxu0 0.0
    %365 = vmatprep.subr.mxu0 0.0
    %366 = vmatpush1.msra.mxu0 0.0
    %367 = vmatprep.subr.mxu0 0.0
    %368 = vmatpush1.msra.mxu0 0.0
    %369 = vmatprep.subr.mxu0 0.0
    %370 = vmatpush1.msra.mxu0 0.0
    %371 = vmatprep.subr.mxu0 0.0
    %372 = vmatpush1.msra.mxu0 0.0
    %373 = vmatprep.subr.mxu0 0.0
    %374 = vmatpush1.msra.mxu0 0.0
    %375 = vmatprep.subr.mxu0 0.0
    %376 = vmatpush1.msra.mxu0 0.0
    %377 = vmatprep.subr.mxu0 0.0
    %378 = vmatpush1.msra.mxu0 0.0
    %379 = vmatprep.subr.mxu0 0.0
    %380 = vmatpush1.msra.mxu0 0.0
    %381 = vmatprep.subr.mxu0 0.0
    %382 = vmatpush1.msra.mxu0 0.0
    %383 = vmatprep.subr.mxu0 0.0
    %384 = vmatpush1.msra.mxu0 %v153
    %385 = vmatprep.subr.mxu0 0.0
    %386 = vmatpush1.msra.mxu0 %v152
    %387 = vmatprep.subr.mxu0 0.0
    %388 = vmatpush1.msra.mxu0 %v151
    %389 = vmatprep.subr.mxu0 0.0
    %390 = vmatpush1.msra.mxu0 %v150
    %391 = vmatprep.subr.mxu0 0.0
    %392 = vmatpush2.msra.mxu0 0.0
    %393 = vmatprep.subr.mxu0 0.0
    %394 = vmatpush2.msra.mxu0 0.0
    %395 = vmatprep.subr.mxu0 0.0
    %396 = vmatpush2.msra.mxu0 0.0
    %397 = vmatprep.subr.mxu0 0.0
    %398 = vmatpush2.msra.mxu0 0.0
    %399 = vmatprep.subr.mxu0 0.0
    %400 = vmatpush2.msra.mxu0 0.0
    %401 = vmatprep.subr.mxu0 0.0
    %402 = vmatpush2.msra.mxu0 0.0
    %403 = vmatprep.subr.mxu0 0.0
    %404 = vmatpush2.msra.mxu0 0.0
    %405 = vmatprep.subr.mxu0 0.0
    %406 = vmatpush2.msra.mxu0 0.0
    %407 = vmatprep.subr.mxu0 0.0
    %408 = vmatpush2.msra.mxu0 0.0
    %409 = vmatprep.subr.mxu0 0.0
    %410 = vmatpush2.msra.mxu0 0.0
    %411 = vmatprep.subr.mxu0 0.0
    %412 = vmatpush2.msra.mxu0 0.0
    %413 = vmatprep.subr.mxu0 0.0
    %414 = vmatpush2.msra.mxu0 0.0
    %415 = vmatprep.subr.mxu0 0.0
    %416 = vmatpush2.msra.mxu0 0.0
    %417 = vmatprep.subr.mxu0 0.0
    %418 = vmatpush2.msra.mxu0 0.0
    %419 = vmatprep.subr.mxu0 0.0
    %420 = vmatpush2.msra.mxu0 0.0
    %421 = vmatprep.subr.mxu0 0.0
    %422 = vmatpush2.msra.mxu0 0.0
    %423 = vmatprep.mubr.f32.mxu0 0.0
    %424 = vmatmul.mubr.f32.gmra.mxu0 %v357
    %v425 = vpop.f32.mrf.mxu0
    %v426 = vadd.f32 0.0, %v425
    %v427 = vpop.f32.mrf.mxu0
    %428 = vdwg.mxu0
    %v430 = vrot.slane %v426, 6
    %v432 = vadd.f32 %v140, %v430
    %v434 = vrot.slane %v353, 6
    %435 = vrot.lane.b32.xlu0 %v434, 32
    %v436 = vpop.permute.xlu0 %435
    %v437 = vsel %vm66, %v436, 0
    %439 = vmatprep.subr.mxu0 0.0
    %440 = vmatpush1.msra.mxu0 0.0
    %441 = vmatprep.subr.mxu0 0.0
    %442 = vmatpush1.msra.mxu0 0.0
    %443 = vmatprep.subr.mxu0 0.0
    %444 = vmatpush1.msra.mxu0 0.0
    %445 = vmatprep.subr.mxu0 0.0
    %446 = vmatpush1.msra.mxu0 0.0
    %447 = vmatprep.subr.mxu0 0.0
    %448 = vmatpush1.msra.mxu0 0.0
    %449 = vmatprep.subr.mxu0 0.0
    %450 = vmatpush1.msra.mxu0 0.0
    %451 = vmatprep.subr.mxu0 0.0
    %452 = vmatpush1.msra.mxu0 0.0
    %453 = vmatprep.subr.mxu0 0.0
    %454 = vmatpush1.msra.mxu0 0.0
    %455 = vmatprep.subr.mxu0 0.0
    %456 = vmatpush1.msra.mxu0 0.0
    %457 = vmatprep.subr.mxu0 0.0
    %458 = vmatpush1.msra.mxu0 0.0
    %459 = vmatprep.subr.mxu0 0.0
    %460 = vmatpush1.msra.mxu0 0.0
    %461 = vmatprep.subr.mxu0 0.0
    %462 = vmatpush1.msra.mxu0 0.0
    %463 = vmatprep.subr.mxu0 0.0
    %464 = vmatpush1.msra.mxu0 %v157
    %465 = vmatprep.subr.mxu0 0.0
    %466 = vmatpush1.msra.mxu0 %v156
    %467 = vmatprep.subr.mxu0 0.0
    %468 = vmatpush1.msra.mxu0 %v155
    %469 = vmatprep.subr.mxu0 0.0
    %470 = vmatpush1.msra.mxu0 %v154
    %471 = vmatprep.subr.mxu0 0.0
    %472 = vmatpush2.msra.mxu0 0.0
    %473 = vmatprep.subr.mxu0 0.0
    %474 = vmatpush2.msra.mxu0 0.0
    %475 = vmatprep.subr.mxu0 0.0
    %476 = vmatpush2.msra.mxu0 0.0
    %477 = vmatprep.subr.mxu0 0.0
    %478 = vmatpush2.msra.mxu0 0.0
    %479 = vmatprep.subr.mxu0 0.0
    %480 = vmatpush2.msra.mxu0 0.0
    %481 = vmatprep.subr.mxu0 0.0
    %482 = vmatpush2.msra.mxu0 0.0
    %483 = vmatprep.subr.mxu0 0.0
    %484 = vmatpush2.msra.mxu0 0.0
    %485 = vmatprep.subr.mxu0 0.0
    %486 = vmatpush2.msra.mxu0 0.0
    %487 = vmatprep.subr.mxu0 0.0
    %488 = vmatpush2.msra.mxu0 0.0
    %489 = vmatprep.subr.mxu0 0.0
    %490 = vmatpush2.msra.mxu0 0.0
    %491 = vmatprep.subr.mxu0 0.0
    %492 = vmatpush2.msra.mxu0 0.0
    %493 = vmatprep.subr.mxu0 0.0
    %494 = vmatpush2.msra.mxu0 0.0
    %495 = vmatprep.subr.mxu0 0.0
    %496 = vmatpush2.msra.mxu0 0.0
    %497 = vmatprep.subr.mxu0 0.0
    %498 = vmatpush2.msra.mxu0 0.0
    %499 = vmatprep.subr.mxu0 0.0
    %500 = vmatpush2.msra.mxu0 0.0
    %501 = vmatprep.subr.mxu0 0.0
    %502 = vmatpush2.msra.mxu0 0.0
    %503 = vmatprep.mubr.f32.mxu0 0.0
    %504 = vmatmul.mubr.f32.gmra.mxu0 %v437
    %v505 = vpop.f32.mrf.mxu0
    %v506 = vadd.f32 0.0, %v505
    %v507 = vpop.f32.mrf.mxu0
    %508 = vdwg.mxu0
    %v510 = vrot.slane %v506, 4
    %v512 = vadd.f32 %v148, %v510
    %v513 = vxor.u32 %v432, 2147483648
    %v514 = vmul.f32 %v513, 1.442695
    %v515 = vpow.pop %v514
    %v516 = vadd.f32 %v515, 1.0
    %v517 = vrcp.pop %v516
    %v518 = vmul.f32 1.0, %v517
    %v519 = vxor.u32 %v512, 2147483648
    %v520 = vmul.f32 %v519, 1.442695
    %v521 = vpow.pop %v520
    %v522 = vadd.f32 %v521, 1.0
    %v523 = vrcp.pop %v522
    %v524 = vmul.f32 1.0, %v523
    %v526 = vrot.slane %v329, 6
    %v528 = vmul.f32 %v518, %v526
    %v529 = vtanh.pop %v432
    %531 = vrot.lane.b32.xlu0 %v529, 64
    %v532 = vpop.permute.xlu0 %531
    %v534 = vmul.f32 %v518, %v532
    %536 = vrot.lane.b32.xlu0 %v534, 32
    %v537 = vpop.permute.xlu0 %536
    %v539 = vadd.f32 %v528, %v537
    %v541 = vrot.slane %v341, 2
    %v543 = vmul.f32 %v524, %v541
    %v544 = vtanh.pop %v512
    %546 = vrot.lane.b32.xlu0 %v544, 64
    %v547 = vpop.permute.xlu0 %546
    %v549 = vmul.f32 %v524, %v547
    %551 = vrot.lane.b32.xlu0 %v549, 32
    %v552 = vpop.permute.xlu0 %551
    %v554 = vadd.f32 %v543, %v552
    %v555 = vtanh.pop %v539
    %557 = vrot.lane.b32.xlu0 %v555, 64
    %v558 = vpop.permute.xlu0 %557
    %v560 = vmul.f32 %v518, %v558
    %v561 = vtanh.pop %v554
    %563 = vrot.lane.b32.xlu0 %v561, 64
    %v564 = vpop.permute.xlu0 %563
    %v566 = vmul.f32 %v524, %v564
    %v568 = vrot.slane %v560, 2
    %569 = vrot.lane.b32.xlu0 %v568, 32
    %v570 = vpop.permute.xlu0 %569
    %v571 = vsel %vm66, %v570, 0
    %573 = vmatprep.subr.mxu0 0.0
    %574 = vmatpush1.msra.mxu0 0.0
    %575 = vmatprep.subr.mxu0 0.0
    %576 = vmatpush1.msra.mxu0 0.0
    %577 = vmatprep.subr.mxu0 0.0
    %578 = vmatpush1.msra.mxu0 0.0
    %579 = vmatprep.subr.mxu0 0.0
    %580 = vmatpush1.msra.mxu0 0.0
    %581 = vmatprep.subr.mxu0 0.0
    %582 = vmatpush1.msra.mxu0 0.0
    %583 = vmatprep.subr.mxu0 0.0
    %584 = vmatpush1.msra.mxu0 0.0
    %585 = vmatprep.subr.mxu0 0.0
    %586 = vmatpush1.msra.mxu0 0.0
    %587 = vmatprep.subr.mxu0 0.0
    %588 = vmatpush1.msra.mxu0 0.0
    %589 = vmatprep.subr.mxu0 0.0
    %590 = vmatpush1.msra.mxu0 0.0
    %591 = vmatprep.subr.mxu0 0.0
    %592 = vmatpush1.msra.mxu0 0.0
    %593 = vmatprep.subr.mxu0 0.0
    %594 = vmatpush1.msra.mxu0 0.0
    %595 = vmatprep.subr.mxu0 0.0
    %596 = vmatpush1.msra.mxu0 0.0
    %597 = vmatprep.subr.mxu0 0.0
    %598 = vmatpush1.msra.mxu0 %v153
    %599 = vmatprep.subr.mxu0 0.0
    %600 = vmatpush1.msra.mxu0 %v152
    %601 = vmatprep.subr.mxu0 0.0
    %602 = vmatpush1.msra.mxu0 %v151
    %603 = vmatprep.subr.mxu0 0.0
    %604 = vmatpush1.msra.mxu0 %v150
    %605 = vmatprep.subr.mxu0 0.0
    %606 = vmatpush2.msra.mxu0 0.0
    %607 = vmatprep.subr.mxu0 0.0
    %608 = vmatpush2.msra.mxu0 0.0
    %609 = vmatprep.subr.mxu0 0.0
    %610 = vmatpush2.msra.mxu0 0.0
    %611 = vmatprep.subr.mxu0 0.0
    %612 = vmatpush2.msra.mxu0 0.0
    %613 = vmatprep.subr.mxu0 0.0
    %614 = vmatpush2.msra.mxu0 0.0
    %615 = vmatprep.subr.mxu0 0.0
    %616 = vmatpush2.msra.mxu0 0.0
    %617 = vmatprep.subr.mxu0 0.0
    %618 = vmatpush2.msra.mxu0 0.0
    %619 = vmatprep.subr.mxu0 0.0
    %620 = vmatpush2.msra.mxu0 0.0
    %621 = vmatprep.subr.mxu0 0.0
    %622 = vmatpush2.msra.mxu0 0.0
    %623 = vmatprep.subr.mxu0 0.0
    %624 = vmatpush2.msra.mxu0 0.0
    %625 = vmatprep.subr.mxu0 0.0
    %626 = vmatpush2.msra.mxu0 0.0
    %627 = vmatprep.subr.mxu0 0.0
    %628 = vmatpush2.msra.mxu0 0.0
    %629 = vmatprep.subr.mxu0 0.0
    %630 = vmatpush2.msra.mxu0 0.0
    %631 = vmatprep.subr.mxu0 0.0
    %632 = vmatpush2.msra.mxu0 0.0
    %633 = vmatprep.subr.mxu0 0.0
    %634 = vmatpush2.msra.mxu0 0.0
    %635 = vmatprep.subr.mxu0 0.0
    %636 = vmatpush2.msra.mxu0 0.0
    %637 = vmatprep.mubr.f32.mxu0 0.0
    %638 = vmatmul.mubr.f32.gmra.mxu0 %v571
    %v639 = vpop.f32.mrf.mxu0
    %v640 = vadd.f32 0.0, %v639
    %v641 = vpop.f32.mrf.mxu0
    %642 = vdwg.mxu0
    %v644 = vrot.slane %v640, 4
    %v646 = vadd.f32 %v140, %v644
    %v648 = vrot.slane %v566, 4
    %649 = vrot.lane.b32.xlu0 %v648, 32
    %v650 = vpop.permute.xlu0 %649
    %v651 = vsel %vm66, %v650, 0
    %653 = vmatprep.subr.mxu0 0.0
    %654 = vmatpush1.msra.mxu0 0.0
    %655 = vmatprep.subr.mxu0 0.0
    %656 = vmatpush1.msra.mxu0 0.0
    %657 = vmatprep.subr.mxu0 0.0
    %658 = vmatpush1.msra.mxu0 0.0
    %659 = vmatprep.subr.mxu0 0.0
    %660 = vmatpush1.msra.mxu0 0.0
    %661 = vmatprep.subr.mxu0 0.0
    %662 = vmatpush1.msra.mxu0 0.0
    %663 = vmatprep.subr.mxu0 0.0
    %664 = vmatpush1.msra.mxu0 0.0
    %665 = vmatprep.subr.mxu0 0.0
    %666 = vmatpush1.msra.mxu0 0.0
    %667 = vmatprep.subr.mxu0 0.0
    %668 = vmatpush1.msra.mxu0 0.0
    %669 = vmatprep.subr.mxu0 0.0
    %670 = vmatpush1.msra.mxu0 0.0
    %671 = vmatprep.subr.mxu0 0.0
    %672 = vmatpush1.msra.mxu0 0.0
    %673 = vmatprep.subr.mxu0 0.0
    %674 = vmatpush1.msra.mxu0 0.0
    %675 = vmatprep.subr.mxu0 0.0
    %676 = vmatpush1.msra.mxu0 0.0
    %677 = vmatprep.subr.mxu0 0.0
    %678 = vmatpush1.msra.mxu0 %v157
    %679 = vmatprep.subr.mxu0 0.0
    %680 = vmatpush1.msra.mxu0 %v156
    %681 = vmatprep.subr.mxu0 0.0
    %682 = vmatpush1.msra.mxu0 %v155
    %683 = vmatprep.subr.mxu0 0.0
    %684 = vmatpush1.msra.mxu0 %v154
    %685 = vmatprep.subr.mxu0 0.0
    %686 = vmatpush2.msra.mxu0 0.0
    %687 = vmatprep.subr.mxu0 0.0
    %688 = vmatpush2.msra.mxu0 0.0
    %689 = vmatprep.subr.mxu0 0.0
    %690 = vmatpush2.msra.mxu0 0.0
    %691 = vmatprep.subr.mxu0 0.0
    %692 = vmatpush2.msra.mxu0 0.0
    %693 = vmatprep.subr.mxu0 0.0
    %694 = vmatpush2.msra.mxu0 0.0
    %695 = vmatprep.subr.mxu0 0.0
    %696 = vmatpush2.msra.mxu0 0.0
    %697 = vmatprep.subr.mxu0 0.0
    %698 = vmatpush2.msra.mxu0 0.0
    %699 = vmatprep.subr.mxu0 0.0
    %700 = vmatpush2.msra.mxu0 0.0
    %701 = vmatprep.subr.mxu0 0.0
    %702 = vmatpush2.msra.mxu0 0.0
    %703 = vmatprep.subr.mxu0 0.0
    %704 = vmatpush2.msra.mxu0 0.0
    %705 = vmatprep.subr.mxu0 0.0
    %706 = vmatpush2.msra.mxu0 0.0
    %707 = vmatprep.subr.mxu0 0.0
    %708 = vmatpush2.msra.mxu0 0.0
    %709 = vmatprep.subr.mxu0 0.0
    %710 = vmatpush2.msra.mxu0 0.0
    %711 = vmatprep.subr.mxu0 0.0
    %712 = vmatpush2.msra.mxu0 0.0
    %713 = vmatprep.subr.mxu0 0.0
    %714 = vmatpush2.msra.mxu0 0.0
    %715 = vmatprep.subr.mxu0 0.0
    %716 = vmatpush2.msra.mxu0 0.0
    %717 = vmatprep.mubr.f32.mxu0 0.0
    %718 = vmatmul.mubr.f32.gmra.mxu0 %v651
    %v719 = vpop.f32.mrf.mxu0
    %v720 = vadd.f32 0.0, %v719
    %v721 = vpop.f32.mrf.mxu0
    %722 = vdwg.mxu0
    %v724 = vrot.slane %v720, 6
    %v726 = vadd.f32 %v148, %v724
    %v727 = vxor.u32 %v646, 2147483648
    %v728 = vmul.f32 %v727, 1.442695
    %v729 = vpow.pop %v728
    %v730 = vadd.f32 %v729, 1.0
    %v731 = vrcp.pop %v730
    %v732 = vmul.f32 1.0, %v731
    %v733 = vxor.u32 %v726, 2147483648
    %v734 = vmul.f32 %v733, 1.442695
    %v735 = vpow.pop %v734
    %v736 = vadd.f32 %v735, 1.0
    %v737 = vrcp.pop %v736
    %v738 = vmul.f32 1.0, %v737
    %v740 = vrot.slane %v539, 6
    %v742 = vmul.f32 %v732, %v740
    %v743 = vtanh.pop %v646
    %745 = vrot.lane.b32.xlu0 %v743, 64
    %v746 = vpop.permute.xlu0 %745
    %v748 = vmul.f32 %v732, %v746
    %750 = vrot.lane.b32.xlu0 %v748, 32
    %v751 = vpop.permute.xlu0 %750
    %v753 = vadd.f32 %v742, %v751
    %v755 = vrot.slane %v554, 2
    %v757 = vmul.f32 %v738, %v755
    %v758 = vtanh.pop %v726
    %760 = vrot.lane.b32.xlu0 %v758, 64
    %v761 = vpop.permute.xlu0 %760
    %v763 = vmul.f32 %v738, %v761
    %765 = vrot.lane.b32.xlu0 %v763, 32
    %v766 = vpop.permute.xlu0 %765
    %v768 = vadd.f32 %v757, %v766
    %v769 = vtanh.pop %v753
    %771 = vrot.lane.b32.xlu0 %v769, 64
    %v772 = vpop.permute.xlu0 %771
    %v774 = vmul.f32 %v732, %v772
    %v775 = vtanh.pop %v768
    %777 = vrot.lane.b32.xlu0 %v775, 64
    %v778 = vpop.permute.xlu0 %777
    %v780 = vmul.f32 %v738, %v778
    %v782 = vrot.slane %v774, 4
    %783 = vrot.lane.b32.xlu0 %v782, 32
    %v784 = vpop.permute.xlu0 %783
    %v785 = vsel %vm66, %v784, 0
    %787 = vmatprep.subr.mxu0 0.0
    %788 = vmatpush1.msra.mxu0 0.0
    %789 = vmatprep.subr.mxu0 0.0
    %790 = vmatpush1.msra.mxu0 0.0
    %791 = vmatprep.subr.mxu0 0.0
    %792 = vmatpush1.msra.mxu0 0.0
    %793 = vmatprep.subr.mxu0 0.0
    %794 = vmatpush1.msra.mxu0 0.0
    %795 = vmatprep.subr.mxu0 0.0
    %796 = vmatpush1.msra.mxu0 0.0
    %797 = vmatprep.subr.mxu0 0.0
    %798 = vmatpush1.msra.mxu0 0.0
    %799 = vmatprep.subr.mxu0 0.0
    %800 = vmatpush1.msra.mxu0 0.0
    %801 = vmatprep.subr.mxu0 0.0
    %802 = vmatpush1.msra.mxu0 0.0
    %803 = vmatprep.subr.mxu0 0.0
    %804 = vmatpush1.msra.mxu0 0.0
    %805 = vmatprep.subr.mxu0 0.0
    %806 = vmatpush1.msra.mxu0 0.0
    %807 = vmatprep.subr.mxu0 0.0
    %808 = vmatpush1.msra.mxu0 0.0
    %809 = vmatprep.subr.mxu0 0.0
    %810 = vmatpush1.msra.mxu0 0.0
    %811 = vmatprep.subr.mxu0 0.0
    %812 = vmatpush1.msra.mxu0 %v153
    %813 = vmatprep.subr.mxu0 0.0
    %814 = vmatpush1.msra.mxu0 %v152
    %815 = vmatprep.subr.mxu0 0.0
    %816 = vmatpush1.msra.mxu0 %v151
    %817 = vmatprep.subr.mxu0 0.0
    %818 = vmatpush1.msra.mxu0 %v150
    %819 = vmatprep.subr.mxu0 0.0
    %820 = vmatpush2.msra.mxu0 0.0
    %821 = vmatprep.subr.mxu0 0.0
    %822 = vmatpush2.msra.mxu0 0.0
    %823 = vmatprep.subr.mxu0 0.0
    %824 = vmatpush2.msra.mxu0 0.0
    %825 = vmatprep.subr.mxu0 0.0
    %826 = vmatpush2.msra.mxu0 0.0
    %827 = vmatprep.subr.mxu0 0.0
    %828 = vmatpush2.msra.mxu0 0.0
    %829 = vmatprep.subr.mxu0 0.0
    %830 = vmatpush2.msra.mxu0 0.0
    %831 = vmatprep.subr.mxu0 0.0
    %832 = vmatpush2.msra.mxu0 0.0
    %833 = vmatprep.subr.mxu0 0.0
    %834 = vmatpush2.msra.mxu0 0.0
    %835 = vmatprep.subr.mxu0 0.0
    %836 = vmatpush2.msra.mxu0 0.0
    %837 = vmatprep.subr.mxu0 0.0
    %838 = vmatpush2.msra.mxu0 0.0
    %839 = vmatprep.subr.mxu0 0.0
    %840 = vmatpush2.msra.mxu0 0.0
    %841 = vmatprep.subr.mxu0 0.0
    %842 = vmatpush2.msra.mxu0 0.0
    %843 = vmatprep.subr.mxu0 0.0
    %844 = vmatpush2.msra.mxu0 0.0
    %845 = vmatprep.subr.mxu0 0.0
    %846 = vmatpush2.msra.mxu0 0.0
    %847 = vmatprep.subr.mxu0 0.0
    %848 = vmatpush2.msra.mxu0 0.0
    %849 = vmatprep.subr.mxu0 0.0
    %850 = vmatpush2.msra.mxu0 0.0
    %851 = vmatprep.mubr.f32.mxu0 0.0
    %852 = vmatmul.mubr.f32.gmra.mxu0 %v785
    %v853 = vpop.f32.mrf.mxu0
    %v854 = vadd.f32 0.0, %v853
    %v855 = vpop.f32.mrf.mxu0
    %856 = vdwg.mxu0
    %v858 = vrot.slane %v854, 2
    %v860 = vadd.f32 %v140, %v858
    %v862 = vrot.slane %v780, 2
    %863 = vrot.lane.b32.xlu0 %v862, 32
    %v864 = vpop.permute.xlu0 %863
    %v865 = vsel %vm66, %v864, 0
    %867 = vmatprep.subr.mxu0 0.0
    %868 = vmatpush1.msra.mxu0 0.0
    %869 = vmatprep.subr.mxu0 0.0
    %870 = vmatpush1.msra.mxu0 0.0
    %871 = vmatprep.subr.mxu0 0.0
    %872 = vmatpush1.msra.mxu0 0.0
    %873 = vmatprep.subr.mxu0 0.0
    %874 = vmatpush1.msra.mxu0 0.0
    %875 = vmatprep.subr.mxu0 0.0
    %876 = vmatpush1.msra.mxu0 0.0
    %877 = vmatprep.subr.mxu0 0.0
    %878 = vmatpush1.msra.mxu0 0.0
    %879 = vmatprep.subr.mxu0 0.0
    %880 = vmatpush1.msra.mxu0 0.0
    %881 = vmatprep.subr.mxu0 0.0
    %882 = vmatpush1.msra.mxu0 0.0
    %883 = vmatprep.subr.mxu0 0.0
    %884 = vmatpush1.msra.mxu0 0.0
    %885 = vmatprep.subr.mxu0 0.0
    %886 = vmatpush1.msra.mxu0 0.0
    %887 = vmatprep.subr.mxu0 0.0
    %888 = vmatpush1.msra.mxu0 0.0
    %889 = vmatprep.subr.mxu0 0.0
    %890 = vmatpush1.msra.mxu0 0.0
    %891 = vmatprep.subr.mxu0 0.0
    %892 = vmatpush1.msra.mxu0 %v157
    %893 = vmatprep.subr.mxu0 0.0
    %894 = vmatpush1.msra.mxu0 %v156
    %895 = vmatprep.subr.mxu0 0.0
    %896 = vmatpush1.msra.mxu0 %v155
    %897 = vmatprep.subr.mxu0 0.0
    %898 = vmatpush1.msra.mxu0 %v154
    %899 = vmatprep.subr.mxu0 0.0
    %900 = vmatpush2.msra.mxu0 0.0
    %901 = vmatprep.subr.mxu0 0.0
    %902 = vmatpush2.msra.mxu0 0.0
    %903 = vmatprep.subr.mxu0 0.0
    %904 = vmatpush2.msra.mxu0 0.0
    %905 = vmatprep.subr.mxu0 0.0
    %906 = vmatpush2.msra.mxu0 0.0
    %907 = vmatprep.subr.mxu0 0.0
    %908 = vmatpush2.msra.mxu0 0.0
    %909 = vmatprep.subr.mxu0 0.0
    %910 = vmatpush2.msra.mxu0 0.0
    %911 = vmatprep.subr.mxu0 0.0
    %912 = vmatpush2.msra.mxu0 0.0
    %913 = vmatprep.subr.mxu0 0.0
    %914 = vmatpush2.msra.mxu0 0.0
    %915 = vmatprep.subr.mxu0 0.0
    %916 = vmatpush2.msra.mxu0 0.0
    %917 = vmatprep.subr.mxu0 0.0
    %918 = vmatpush2.msra.mxu0 0.0
    %919 = vmatprep.subr.mxu0 0.0
    %920 = vmatpush2.msra.mxu0 0.0
    %921 = vmatprep.subr.mxu0 0.0
    %922 = vmatpush2.msra.mxu0 0.0
    %923 = vmatprep.subr.mxu0 0.0
    %924 = vmatpush2.msra.mxu0 0.0
    %925 = vmatprep.subr.mxu0 0.0
    %926 = vmatpush2.msra.mxu0 0.0
    %927 = vmatprep.subr.mxu0 0.0
    %928 = vmatpush2.msra.mxu0 0.0
    %929 = vmatprep.subr.mxu0 0.0
    %930 = vmatpush2.msra.mxu0 0.0
    %931 = vmatprep.mubr.f32.mxu0 0.0
    %932 = vmatmul.mubr.f32.gmra.mxu0 %v865
    %v933 = vpop.f32.mrf.mxu0
    %v934 = vadd.f32 0.0, %v933
    %v935 = vpop.f32.mrf.mxu0
    %936 = vdwg.mxu0
    %v937 = vadd.f32 %v148, %v934
    %v938 = vxor.u32 %v860, 2147483648
    %v939 = vmul.f32 %v938, 1.442695
    %v940 = vpow.pop %v939
    %v941 = vadd.f32 %v940, 1.0
    %v942 = vrcp.pop %v941
    %v943 = vmul.f32 1.0, %v942
    %v944 = vxor.u32 %v937, 2147483648
    %v945 = vmul.f32 %v944, 1.442695
    %v946 = vpow.pop %v945
    %v947 = vadd.f32 %v946, 1.0
    %v948 = vrcp.pop %v947
    %v949 = vmul.f32 1.0, %v948
    %v951 = vrot.slane %v753, 6
    %v953 = vmul.f32 %v943, %v951
    %v954 = vtanh.pop %v860
    %956 = vrot.lane.b32.xlu0 %v954, 64
    %v957 = vpop.permute.xlu0 %956
    %v959 = vmul.f32 %v943, %v957
    %961 = vrot.lane.b32.xlu0 %v959, 32
    %v962 = vpop.permute.xlu0 %961
    %v964 = vadd.f32 %v953, %v962
    %v966 = vrot.slane %v768, 2
    %v968 = vmul.f32 %v949, %v966
    %v969 = vtanh.pop %v937
    %971 = vrot.lane.b32.xlu0 %v969, 64
    %v972 = vpop.permute.xlu0 %971
    %v974 = vmul.f32 %v949, %v972
    %976 = vrot.lane.b32.xlu0 %v974, 32
    %v977 = vpop.permute.xlu0 %976
    %v979 = vadd.f32 %v968, %v977
    %v980 = vtanh.pop %v964
    %982 = vrot.lane.b32.xlu0 %v980, 64
    %v983 = vpop.permute.xlu0 %982
    %v985 = vmul.f32 %v943, %v983
    %v986 = vtanh.pop %v979
    %988 = vrot.lane.b32.xlu0 %v986, 64
    %v989 = vpop.permute.xlu0 %988
    %v991 = vmul.f32 %v949, %v989
    %v993 = vrot.slane %v985, 6
    %994 = vrot.lane.b32.xlu0 %v993, 32
    %v995 = vpop.permute.xlu0 %994
    %v996 = vsel %vm66, %v995, 0
    %998 = vmatprep.subr.mxu0 0.0
    %999 = vmatpush1.msra.mxu0 0.0
    %1000 = vmatprep.subr.mxu0 0.0
    %1001 = vmatpush1.msra.mxu0 0.0
    %1002 = vmatprep.subr.mxu0 0.0
    %1003 = vmatpush1.msra.mxu0 0.0
    %1004 = vmatprep.subr.mxu0 0.0
    %1005 = vmatpush1.msra.mxu0 0.0
    %1006 = vmatprep.subr.mxu0 0.0
    %1007 = vmatpush1.msra.mxu0 0.0
    %1008 = vmatprep.subr.mxu0 0.0
    %1009 = vmatpush1.msra.mxu0 0.0
    %1010 = vmatprep.subr.mxu0 0.0
    %1011 = vmatpush1.msra.mxu0 0.0
    %1012 = vmatprep.subr.mxu0 0.0
    %1013 = vmatpush1.msra.mxu0 0.0
    %1014 = vmatprep.subr.mxu0 0.0
    %1015 = vmatpush1.msra.mxu0 0.0
    %1016 = vmatprep.subr.mxu0 0.0
    %1017 = vmatpush1.msra.mxu0 0.0
    %1018 = vmatprep.subr.mxu0 0.0
    %1019 = vmatpush1.msra.mxu0 0.0
    %1020 = vmatprep.subr.mxu0 0.0
    %1021 = vmatpush1.msra.mxu0 0.0
    %1022 = vmatprep.subr.mxu0 0.0
    %1023 = vmatpush1.msra.mxu0 %v153
    %1024 = vmatprep.subr.mxu0 0.0
    %1025 = vmatpush1.msra.mxu0 %v152
    %1026 = vmatprep.subr.mxu0 0.0
    %1027 = vmatpush1.msra.mxu0 %v151
    %1028 = vmatprep.subr.mxu0 0.0
    %1029 = vmatpush1.msra.mxu0 %v150
    %1030 = vmatprep.subr.mxu0 0.0
    %1031 = vmatpush2.msra.mxu0 0.0
    %1032 = vmatprep.subr.mxu0 0.0
    %1033 = vmatpush2.msra.mxu0 0.0
    %1034 = vmatprep.subr.mxu0 0.0
    %1035 = vmatpush2.msra.mxu0 0.0
    %1036 = vmatprep.subr.mxu0 0.0
    %1037 = vmatpush2.msra.mxu0 0.0
    %1038 = vmatprep.subr.mxu0 0.0
    %1039 = vmatpush2.msra.mxu0 0.0
    %1040 = vmatprep.subr.mxu0 0.0
    %1041 = vmatpush2.msra.mxu0 0.0
    %1042 = vmatprep.subr.mxu0 0.0
    %1043 = vmatpush2.msra.mxu0 0.0
    %1044 = vmatprep.subr.mxu0 0.0
    %1045 = vmatpush2.msra.mxu0 0.0
    %1046 = vmatprep.subr.mxu0 0.0
    %1047 = vmatpush2.msra.mxu0 0.0
    %1048 = vmatprep.subr.mxu0 0.0
    %1049 = vmatpush2.msra.mxu0 0.0
    %1050 = vmatprep.subr.mxu0 0.0
    %1051 = vmatpush2.msra.mxu0 0.0
    %1052 = vmatprep.subr.mxu0 0.0
    %1053 = vmatpush2.msra.mxu0 0.0
    %1054 = vmatprep.subr.mxu0 0.0
    %1055 = vmatpush2.msra.mxu0 0.0
    %1056 = vmatprep.subr.mxu0 0.0
    %1057 = vmatpush2.msra.mxu0 0.0
    %1058 = vmatprep.subr.mxu0 0.0
    %1059 = vmatpush2.msra.mxu0 0.0
    %1060 = vmatprep.subr.mxu0 0.0
    %1061 = vmatpush2.msra.mxu0 0.0
    %1062 = vmatprep.mubr.f32.mxu0 0.0
    %1063 = vmatmul.mubr.f32.gmra.mxu0 %v996
    %v1064 = vpop.f32.mrf.mxu0
    %v1065 = vadd.f32 0.0, %v1064
    %v1066 = vpop.f32.mrf.mxu0
    %1067 = vdwg.mxu0
    %v1068 = vadd.f32 %v146, %v1065
    %1070 = vrot.lane.b32.xlu0 %v991, 32
    %v1071 = vpop.permute.xlu0 %1070
    %v1072 = vsel %vm66, %v1071, 0
    %1074 = vmatprep.subr.mxu0 0.0
    %1075 = vmatpush1.msra.mxu0 0.0
    %1076 = vmatprep.subr.mxu0 0.0
    %1077 = vmatpush1.msra.mxu0 0.0
    %1078 = vmatprep.subr.mxu0 0.0
    %1079 = vmatpush1.msra.mxu0 0.0
    %1080 = vmatprep.subr.mxu0 0.0
    %1081 = vmatpush1.msra.mxu0 0.0
    %1082 = vmatprep.subr.mxu0 0.0
    %1083 = vmatpush1.msra.mxu0 0.0
    %1084 = vmatprep.subr.mxu0 0.0
    %1085 = vmatpush1.msra.mxu0 0.0
    %1086 = vmatprep.subr.mxu0 0.0
    %1087 = vmatpush1.msra.mxu0 0.0
    %1088 = vmatprep.subr.mxu0 0.0
    %1089 = vmatpush1.msra.mxu0 0.0
    %1090 = vmatprep.subr.mxu0 0.0
    %1091 = vmatpush1.msra.mxu0 0.0
    %1092 = vmatprep.subr.mxu0 0.0
    %1093 = vmatpush1.msra.mxu0 0.0
    %1094 = vmatprep.subr.mxu0 0.0
    %1095 = vmatpush1.msra.mxu0 0.0
    %1096 = vmatprep.subr.mxu0 0.0
    %1097 = vmatpush1.msra.mxu0 0.0
    %1098 = vmatprep.subr.mxu0 0.0
    %1099 = vmatpush1.msra.mxu0 %v157
    %1100 = vmatprep.subr.mxu0 0.0
    %1101 = vmatpush1.msra.mxu0 %v156
    %1102 = vmatprep.subr.mxu0 0.0
    %1103 = vmatpush1.msra.mxu0 %v155
    %1104 = vmatprep.subr.mxu0 0.0
    %1105 = vmatpush1.msra.mxu0 %v154
    %1106 = vmatprep.subr.mxu0 0.0
    %1107 = vmatpush2.msra.mxu0 0.0
    %1108 = vmatprep.subr.mxu0 0.0
    %1109 = vmatpush2.msra.mxu0 0.0
    %1110 = vmatprep.subr.mxu0 0.0
    %1111 = vmatpush2.msra.mxu0 0.0
    %1112 = vmatprep.subr.mxu0 0.0
    %1113 = vmatpush2.msra.mxu0 0.0
    %1114 = vmatprep.subr.mxu0 0.0
    %1115 = vmatpush2.msra.mxu0 0.0
    %1116 = vmatprep.subr.mxu0 0.0
    %1117 = vmatpush2.msra.mxu0 0.0
    %1118 = vmatprep.subr.mxu0 0.0
    %1119 = vmatpush2.msra.mxu0 0.0
    %1120 = vmatprep.subr.mxu0 0.0
    %1121 = vmatpush2.msra.mxu0 0.0
    %1122 = vmatprep.subr.mxu0 0.0
    %1123 = vmatpush2.msra.mxu0 0.0
    %1124 = vmatprep.subr.mxu0 0.0
    %1125 = vmatpush2.msra.mxu0 0.0
    %1126 = vmatprep.subr.mxu0 0.0
    %1127 = vmatpush2.msra.mxu0 0.0
    %1128 = vmatprep.subr.mxu0 0.0
    %1129 = vmatpush2.msra.mxu0 0.0
    %1130 = vmatprep.subr.mxu0 0.0
    %1131 = vmatpush2.msra.mxu0 0.0
    %1132 = vmatprep.subr.mxu0 0.0
    %1133 = vmatpush2.msra.mxu0 0.0
    %1134 = vmatprep.subr.mxu0 0.0
    %1135 = vmatpush2.msra.mxu0 0.0
    %1136 = vmatprep.subr.mxu0 0.0
    %1137 = vmatpush2.msra.mxu0 0.0
    %1138 = vmatprep.mubr.f32.mxu0 0.0
    %1139 = vmatmul.mubr.f32.gmra.mxu0 %v1072
    %v1140 = vpop.f32.mrf.mxu0
    %v1141 = vadd.f32 0.0, %v1140
    %v1142 = vpop.f32.mrf.mxu0
    %1143 = vdwg.mxu0
    %v1145 = vrot.slane %v1141, 2
    %v1147 = vadd.f32 %v142, %v1145
    %v1148 = vxor.u32 %v1068, 2147483648
    %v1149 = vmul.f32 %v1148, 1.442695
    %v1150 = vpow.pop %v1149
    %v1151 = vadd.f32 %v1150, 1.0
    %v1152 = vrcp.pop %v1151
    %v1153 = vmul.f32 1.0, %v1152
    %v1154 = vxor.u32 %v1147, 2147483648
    %v1155 = vmul.f32 %v1154, 1.442695
    %v1156 = vpow.pop %v1155
    %v1157 = vadd.f32 %v1156, 1.0
    %v1158 = vrcp.pop %v1157
    %v1159 = vmul.f32 1.0, %v1158
    %v1161 = vrot.slane %v964, 6
    %v1163 = vmul.f32 %v1153, %v1161
    %v1164 = vtanh.pop %v1068
    %1166 = vrot.lane.b32.xlu0 %v1164, 64
    %v1167 = vpop.permute.xlu0 %1166
    %v1169 = vmul.f32 %v1153, %v1167
    %1171 = vrot.lane.b32.xlu0 %v1169, 32
    %v1172 = vpop.permute.xlu0 %1171
    %v1174 = vadd.f32 %v1163, %v1172
    %v1176 = vrot.slane %v979, 2
    %v1178 = vmul.f32 %v1159, %v1176
    %v1179 = vtanh.pop %v1147
    %1181 = vrot.lane.b32.xlu0 %v1179, 64
    %v1182 = vpop.permute.xlu0 %1181
    %v1184 = vmul.f32 %v1159, %v1182
    %1186 = vrot.lane.b32.xlu0 %v1184, 32
    %v1187 = vpop.permute.xlu0 %1186
    %v1189 = vadd.f32 %v1178, %v1187
    %v1190 = vtanh.pop %v1174
    %1192 = vrot.lane.b32.xlu0 %v1190, 64
    %v1193 = vpop.permute.xlu0 %1192
    %v1195 = vmul.f32 %v1153, %v1193
    %v1196 = vtanh.pop %v1189
    %1198 = vrot.lane.b32.xlu0 %v1196, 64
    %v1199 = vpop.permute.xlu0 %1198
    %v1201 = vmul.f32 %v1159, %v1199
    %1203 = vrot.lane.b32.xlu0 %v1195, 32
    %v1204 = vpop.permute.xlu0 %1203
    %v1205 = vsel %vm66, %v1204, 0
    %1207 = vmatprep.subr.mxu0 0.0
    %1208 = vmatpush1.msra.mxu0 0.0
    %1209 = vmatprep.subr.mxu0 0.0
    %1210 = vmatpush1.msra.mxu0 0.0
    %1211 = vmatprep.subr.mxu0 0.0
    %1212 = vmatpush1.msra.mxu0 0.0
    %1213 = vmatprep.subr.mxu0 0.0
    %1214 = vmatpush1.msra.mxu0 0.0
    %1215 = vmatprep.subr.mxu0 0.0
    %1216 = vmatpush1.msra.mxu0 0.0
    %1217 = vmatprep.subr.mxu0 0.0
    %1218 = vmatpush1.msra.mxu0 0.0
    %1219 = vmatprep.subr.mxu0 0.0
    %1220 = vmatpush1.msra.mxu0 0.0
    %1221 = vmatprep.subr.mxu0 0.0
    %1222 = vmatpush1.msra.mxu0 0.0
    %1223 = vmatprep.subr.mxu0 0.0
    %1224 = vmatpush1.msra.mxu0 0.0
    %1225 = vmatprep.subr.mxu0 0.0
    %1226 = vmatpush1.msra.mxu0 0.0
    %1227 = vmatprep.subr.mxu0 0.0
    %1228 = vmatpush1.msra.mxu0 0.0
    %1229 = vmatprep.subr.mxu0 0.0
    %1230 = vmatpush1.msra.mxu0 0.0
    %1231 = vmatprep.subr.mxu0 0.0
    %1232 = vmatpush1.msra.mxu0 %v153
    %1233 = vmatprep.subr.mxu0 0.0
    %1234 = vmatpush1.msra.mxu0 %v152
    %1235 = vmatprep.subr.mxu0 0.0
    %1236 = vmatpush1.msra.mxu0 %v151
    %1237 = vmatprep.subr.mxu0 0.0
    %1238 = vmatpush1.msra.mxu0 %v150
    %1239 = vmatprep.subr.mxu0 0.0
    %1240 = vmatpush2.msra.mxu0 0.0
    %1241 = vmatprep.subr.mxu0 0.0
    %1242 = vmatpush2.msra.mxu0 0.0
    %1243 = vmatprep.subr.mxu0 0.0
    %1244 = vmatpush2.msra.mxu0 0.0
    %1245 = vmatprep.subr.mxu0 0.0
    %1246 = vmatpush2.msra.mxu0 0.0
    %1247 = vmatprep.subr.mxu0 0.0
    %1248 = vmatpush2.msra.mxu0 0.0
    %1249 = vmatprep.subr.mxu0 0.0
    %1250 = vmatpush2.msra.mxu0 0.0
    %1251 = vmatprep.subr.mxu0 0.0
    %1252 = vmatpush2.msra.mxu0 0.0
    %1253 = vmatprep.subr.mxu0 0.0
    %1254 = vmatpush2.msra.mxu0 0.0
    %1255 = vmatprep.subr.mxu0 0.0
    %1256 = vmatpush2.msra.mxu0 0.0
    %1257 = vmatprep.subr.mxu0 0.0
    %1258 = vmatpush2.msra.mxu0 0.0
    %1259 = vmatprep.subr.mxu0 0.0
    %1260 = vmatpush2.msra.mxu0 0.0
    %1261 = vmatprep.subr.mxu0 0.0
    %1262 = vmatpush2.msra.mxu0 0.0
    %1263 = vmatprep.subr.mxu0 0.0
    %1264 = vmatpush2.msra.mxu0 0.0
    %1265 = vmatprep.subr.mxu0 0.0
    %1266 = vmatpush2.msra.mxu0 0.0
    %1267 = vmatprep.subr.mxu0 0.0
    %1268 = vmatpush2.msra.mxu0 0.0
    %1269 = vmatprep.subr.mxu0 0.0
    %1270 = vmatpush2.msra.mxu0 0.0
    %1271 = vmatprep.mubr.f32.mxu0 0.0
    %1272 = vmatmul.mubr.f32.gmra.mxu0 %v1205
    %v1273 = vpop.f32.mrf.mxu0
    %v1274 = vadd.f32 0.0, %v1273
    %v1275 = vpop.f32.mrf.mxu0
    %1276 = vdwg.mxu0
    %v1278 = vrot.slane %v1274, 6
    %v1280 = vadd.f32 %v146, %v1278
    %v1282 = vrot.slane %v1201, 6
    %1283 = vrot.lane.b32.xlu0 %v1282, 32
    %v1284 = vpop.permute.xlu0 %1283
    %v1285 = vsel %vm66, %v1284, 0
    %1287 = vmatprep.subr.mxu0 0.0
    %1288 = vmatpush1.msra.mxu0 0.0
    %1289 = vmatprep.subr.mxu0 0.0
    %1290 = vmatpush1.msra.mxu0 0.0
    %1291 = vmatprep.subr.mxu0 0.0
    %1292 = vmatpush1.msra.mxu0 0.0
    %1293 = vmatprep.subr.mxu0 0.0
    %1294 = vmatpush1.msra.mxu0 0.0
    %1295 = vmatprep.subr.mxu0 0.0
    %1296 = vmatpush1.msra.mxu0 0.0
    %1297 = vmatprep.subr.mxu0 0.0
    %1298 = vmatpush1.msra.mxu0 0.0
    %1299 = vmatprep.subr.mxu0 0.0
    %1300 = vmatpush1.msra.mxu0 0.0
    %1301 = vmatprep.subr.mxu0 0.0
    %1302 = vmatpush1.msra.mxu0 0.0
    %1303 = vmatprep.subr.mxu0 0.0
    %1304 = vmatpush1.msra.mxu0 0.0
    %1305 = vmatprep.subr.mxu0 0.0
    %1306 = vmatpush1.msra.mxu0 0.0
    %1307 = vmatprep.subr.mxu0 0.0
    %1308 = vmatpush1.msra.mxu0 0.0
    %1309 = vmatprep.subr.mxu0 0.0
    %1310 = vmatpush1.msra.mxu0 0.0
    %1311 = vmatprep.subr.mxu0 0.0
    %1312 = vmatpush1.msra.mxu0 %v157
    %1313 = vmatprep.subr.mxu0 0.0
    %1314 = vmatpush1.msra.mxu0 %v156
    %1315 = vmatprep.subr.mxu0 0.0
    %1316 = vmatpush1.msra.mxu0 %v155
    %1317 = vmatprep.subr.mxu0 0.0
    %1318 = vmatpush1.msra.mxu0 %v154
    %1319 = vmatprep.subr.mxu0 0.0
    %1320 = vmatpush2.msra.mxu0 0.0
    %1321 = vmatprep.subr.mxu0 0.0
    %1322 = vmatpush2.msra.mxu0 0.0
    %1323 = vmatprep.subr.mxu0 0.0
    %1324 = vmatpush2.msra.mxu0 0.0
    %1325 = vmatprep.subr.mxu0 0.0
    %1326 = vmatpush2.msra.mxu0 0.0
    %1327 = vmatprep.subr.mxu0 0.0
    %1328 = vmatpush2.msra.mxu0 0.0
    %1329 = vmatprep.subr.mxu0 0.0
    %1330 = vmatpush2.msra.mxu0 0.0
    %1331 = vmatprep.subr.mxu0 0.0
    %1332 = vmatpush2.msra.mxu0 0.0
    %1333 = vmatprep.subr.mxu0 0.0
    %1334 = vmatpush2.msra.mxu0 0.0
    %1335 = vmatprep.subr.mxu0 0.0
    %1336 = vmatpush2.msra.mxu0 0.0
    %1337 = vmatprep.subr.mxu0 0.0
    %1338 = vmatpush2.msra.mxu0 0.0
    %1339 = vmatprep.subr.mxu0 0.0
    %1340 = vmatpush2.msra.mxu0 0.0
    %1341 = vmatprep.subr.mxu0 0.0
    %1342 = vmatpush2.msra.mxu0 0.0
    %1343 = vmatprep.subr.mxu0 0.0
    %1344 = vmatpush2.msra.mxu0 0.0
    %1345 = vmatprep.subr.mxu0 0.0
    %1346 = vmatpush2.msra.mxu0 0.0
    %1347 = vmatprep.subr.mxu0 0.0
    %1348 = vmatpush2.msra.mxu0 0.0
    %1349 = vmatprep.subr.mxu0 0.0
    %1350 = vmatpush2.msra.mxu0 0.0
    %1351 = vmatprep.mubr.f32.mxu0 0.0
    %1352 = vmatmul.mubr.f32.gmra.mxu0 %v1285
    %v1353 = vpop.f32.mrf.mxu0
    %v1354 = vadd.f32 0.0, %v1353
    %v1355 = vpop.f32.mrf.mxu0
    %1356 = vdwg.mxu0
    %v1358 = vrot.slane %v1354, 4
    %v1360 = vadd.f32 %v142, %v1358
    %v1361 = vxor.u32 %v1280, 2147483648
    %v1362 = vmul.f32 %v1361, 1.442695
    %v1363 = vpow.pop %v1362
    %v1364 = vadd.f32 %v1363, 1.0
    %v1365 = vrcp.pop %v1364
    %v1366 = vmul.f32 1.0, %v1365
    %v1367 = vxor.u32 %v1360, 2147483648
    %v1368 = vmul.f32 %v1367, 1.442695
    %v1369 = vpow.pop %v1368
    %v1370 = vadd.f32 %v1369, 1.0
    %v1371 = vrcp.pop %v1370
    %v1372 = vmul.f32 1.0, %v1371
    %v1374 = vrot.slane %v1174, 6
    %v1376 = vmul.f32 %v1366, %v1374
    %v1377 = vtanh.pop %v1280
    %1379 = vrot.lane.b32.xlu0 %v1377, 64
    %v1380 = vpop.permute.xlu0 %1379
    %v1382 = vmul.f32 %v1366, %v1380
    %1384 = vrot.lane.b32.xlu0 %v1382, 32
    %v1385 = vpop.permute.xlu0 %1384
    %v1387 = vadd.f32 %v1376, %v1385
    %v1389 = vrot.slane %v1189, 2
    %v1391 = vmul.f32 %v1372, %v1389
    %v1392 = vtanh.pop %v1360
    %1394 = vrot.lane.b32.xlu0 %v1392, 64
    %v1395 = vpop.permute.xlu0 %1394
    %v1397 = vmul.f32 %v1372, %v1395
    %1399 = vrot.lane.b32.xlu0 %v1397, 32
    %v1400 = vpop.permute.xlu0 %1399
    %v1402 = vadd.f32 %v1391, %v1400
    %v1403 = vtanh.pop %v1387
    %1405 = vrot.lane.b32.xlu0 %v1403, 64
    %v1406 = vpop.permute.xlu0 %1405
    %v1408 = vmul.f32 %v1366, %v1406
    %v1409 = vtanh.pop %v1402
    %1411 = vrot.lane.b32.xlu0 %v1409, 64
    %v1412 = vpop.permute.xlu0 %1411
    %v1414 = vmul.f32 %v1372, %v1412
    %v1416 = vrot.slane %v1408, 2
    %1417 = vrot.lane.b32.xlu0 %v1416, 32
    %v1418 = vpop.permute.xlu0 %1417
    %v1419 = vsel %vm66, %v1418, 0
    %1421 = vmatprep.subr.mxu0 0.0
    %1422 = vmatpush1.msra.mxu0 0.0
    %1423 = vmatprep.subr.mxu0 0.0
    %1424 = vmatpush1.msra.mxu0 0.0
    %1425 = vmatprep.subr.mxu0 0.0
    %1426 = vmatpush1.msra.mxu0 0.0
    %1427 = vmatprep.subr.mxu0 0.0
    %1428 = vmatpush1.msra.mxu0 0.0
    %1429 = vmatprep.subr.mxu0 0.0
    %1430 = vmatpush1.msra.mxu0 0.0
    %1431 = vmatprep.subr.mxu0 0.0
    %1432 = vmatpush1.msra.mxu0 0.0
    %1433 = vmatprep.subr.mxu0 0.0
    %1434 = vmatpush1.msra.mxu0 0.0
    %1435 = vmatprep.subr.mxu0 0.0
    %1436 = vmatpush1.msra.mxu0 0.0
    %1437 = vmatprep.subr.mxu0 0.0
    %1438 = vmatpush1.msra.mxu0 0.0
    %1439 = vmatprep.subr.mxu0 0.0
    %1440 = vmatpush1.msra.mxu0 0.0
    %1441 = vmatprep.subr.mxu0 0.0
    %1442 = vmatpush1.msra.mxu0 0.0
    %1443 = vmatprep.subr.mxu0 0.0
    %1444 = vmatpush1.msra.mxu0 0.0
    %1445 = vmatprep.subr.mxu0 0.0
    %1446 = vmatpush1.msra.mxu0 %v153
    %1447 = vmatprep.subr.mxu0 0.0
    %1448 = vmatpush1.msra.mxu0 %v152
    %1449 = vmatprep.subr.mxu0 0.0
    %1450 = vmatpush1.msra.mxu0 %v151
    %1451 = vmatprep.subr.mxu0 0.0
    %1452 = vmatpush1.msra.mxu0 %v150
    %1453 = vmatprep.subr.mxu0 0.0
    %1454 = vmatpush2.msra.mxu0 0.0
    %1455 = vmatprep.subr.mxu0 0.0
    %1456 = vmatpush2.msra.mxu0 0.0
    %1457 = vmatprep.subr.mxu0 0.0
    %1458 = vmatpush2.msra.mxu0 0.0
    %1459 = vmatprep.subr.mxu0 0.0
    %1460 = vmatpush2.msra.mxu0 0.0
    %1461 = vmatprep.subr.mxu0 0.0
    %1462 = vmatpush2.msra.mxu0 0.0
    %1463 = vmatprep.subr.mxu0 0.0
    %1464 = vmatpush2.msra.mxu0 0.0
    %1465 = vmatprep.subr.mxu0 0.0
    %1466 = vmatpush2.msra.mxu0 0.0
    %1467 = vmatprep.subr.mxu0 0.0
    %1468 = vmatpush2.msra.mxu0 0.0
    %1469 = vmatprep.subr.mxu0 0.0
    %1470 = vmatpush2.msra.mxu0 0.0
    %1471 = vmatprep.subr.mxu0 0.0
    %1472 = vmatpush2.msra.mxu0 0.0
    %1473 = vmatprep.subr.mxu0 0.0
    %1474 = vmatpush2.msra.mxu0 0.0
    %1475 = vmatprep.subr.mxu0 0.0
    %1476 = vmatpush2.msra.mxu0 0.0
    %1477 = vmatprep.subr.mxu0 0.0
    %1478 = vmatpush2.msra.mxu0 0.0
    %1479 = vmatprep.subr.mxu0 0.0
    %1480 = vmatpush2.msra.mxu0 0.0
    %1481 = vmatprep.subr.mxu0 0.0
    %1482 = vmatpush2.msra.mxu0 0.0
    %1483 = vmatprep.subr.mxu0 0.0
    %1484 = vmatpush2.msra.mxu0 0.0
    %1485 = vmatprep.mubr.f32.mxu0 0.0
    %1486 = vmatmul.mubr.f32.gmra.mxu0 %v1419
    %v1487 = vpop.f32.mrf.mxu0
    %v1488 = vadd.f32 0.0, %v1487
    %v1489 = vpop.f32.mrf.mxu0
    %1490 = vdwg.mxu0
    %v1492 = vrot.slane %v1488, 4
    %v1494 = vadd.f32 %v146, %v1492
    %v1496 = vrot.slane %v1414, 4
    %1497 = vrot.lane.b32.xlu0 %v1496, 32
    %v1498 = vpop.permute.xlu0 %1497
    %v1499 = vsel %vm66, %v1498, 0
    %1501 = vmatprep.subr.mxu0 0.0
    %1502 = vmatpush1.msra.mxu0 0.0
    %1503 = vmatprep.subr.mxu0 0.0
    %1504 = vmatpush1.msra.mxu0 0.0
    %1505 = vmatprep.subr.mxu0 0.0
    %1506 = vmatpush1.msra.mxu0 0.0
    %1507 = vmatprep.subr.mxu0 0.0
    %1508 = vmatpush1.msra.mxu0 0.0
    %1509 = vmatprep.subr.mxu0 0.0
    %1510 = vmatpush1.msra.mxu0 0.0
    %1511 = vmatprep.subr.mxu0 0.0
    %1512 = vmatpush1.msra.mxu0 0.0
    %1513 = vmatprep.subr.mxu0 0.0
    %1514 = vmatpush1.msra.mxu0 0.0
    %1515 = vmatprep.subr.mxu0 0.0
    %1516 = vmatpush1.msra.mxu0 0.0
    %1517 = vmatprep.subr.mxu0 0.0
    %1518 = vmatpush1.msra.mxu0 0.0
    %1519 = vmatprep.subr.mxu0 0.0
    %1520 = vmatpush1.msra.mxu0 0.0
    %1521 = vmatprep.subr.mxu0 0.0
    %1522 = vmatpush1.msra.mxu0 0.0
    %1523 = vmatprep.subr.mxu0 0.0
    %1524 = vmatpush1.msra.mxu0 0.0
    %1525 = vmatprep.subr.mxu0 0.0
    %1526 = vmatpush1.msra.mxu0 %v157
    %1527 = vmatprep.subr.mxu0 0.0
    %1528 = vmatpush1.msra.mxu0 %v156
    %1529 = vmatprep.subr.mxu0 0.0
    %1530 = vmatpush1.msra.mxu0 %v155
    %1531 = vmatprep.subr.mxu0 0.0
    %1532 = vmatpush1.msra.mxu0 %v154
    %1533 = vmatprep.subr.mxu0 0.0
    %1534 = vmatpush2.msra.mxu0 0.0
    %1535 = vmatprep.subr.mxu0 0.0
    %1536 = vmatpush2.msra.mxu0 0.0
    %1537 = vmatprep.subr.mxu0 0.0
    %1538 = vmatpush2.msra.mxu0 0.0
    %1539 = vmatprep.subr.mxu0 0.0
    %1540 = vmatpush2.msra.mxu0 0.0
    %1541 = vmatprep.subr.mxu0 0.0
    %1542 = vmatpush2.msra.mxu0 0.0
    %1543 = vmatprep.subr.mxu0 0.0
    %1544 = vmatpush2.msra.mxu0 0.0
    %1545 = vmatprep.subr.mxu0 0.0
    %1546 = vmatpush2.msra.mxu0 0.0
    %1547 = vmatprep.subr.mxu0 0.0
    %1548 = vmatpush2.msra.mxu0 0.0
    %1549 = vmatprep.subr.mxu0 0.0
    %1550 = vmatpush2.msra.mxu0 0.0
    %1551 = vmatprep.subr.mxu0 0.0
    %1552 = vmatpush2.msra.mxu0 0.0
    %1553 = vmatprep.subr.mxu0 0.0
    %1554 = vmatpush2.msra.mxu0 0.0
    %1555 = vmatprep.subr.mxu0 0.0
    %1556 = vmatpush2.msra.mxu0 0.0
    %1557 = vmatprep.subr.mxu0 0.0
    %1558 = vmatpush2.msra.mxu0 0.0
    %1559 = vmatprep.subr.mxu0 0.0
    %1560 = vmatpush2.msra.mxu0 0.0
    %1561 = vmatprep.subr.mxu0 0.0
    %1562 = vmatpush2.msra.mxu0 0.0
    %1563 = vmatprep.subr.mxu0 0.0
    %1564 = vmatpush2.msra.mxu0 0.0
    %1565 = vmatprep.mubr.f32.mxu0 0.0
    %1566 = vmatmul.mubr.f32.gmra.mxu0 %v1499
    %v1567 = vpop.f32.mrf.mxu0
    %v1568 = vadd.f32 0.0, %v1567
    %v1569 = vpop.f32.mrf.mxu0
    %1570 = vdwg.mxu0
    %v1572 = vrot.slane %v1568, 6
    %v1574 = vadd.f32 %v142, %v1572
    %v1575 = vxor.u32 %v1494, 2147483648
    %v1576 = vmul.f32 %v1575, 1.442695
    %v1577 = vpow.pop %v1576
    %v1578 = vadd.f32 %v1577, 1.0
    %v1579 = vrcp.pop %v1578
    %v1580 = vmul.f32 1.0, %v1579
    %v1581 = vxor.u32 %v1574, 2147483648
    %v1582 = vmul.f32 %v1581, 1.442695
    %v1583 = vpow.pop %v1582
    %v1584 = vadd.f32 %v1583, 1.0
    %v1585 = vrcp.pop %v1584
    %v1586 = vmul.f32 1.0, %v1585
    %v1588 = vrot.slane %v1387, 6
    %v1590 = vmul.f32 %v1580, %v1588
    %v1591 = vtanh.pop %v1494
    %1593 = vrot.lane.b32.xlu0 %v1591, 64
    %v1594 = vpop.permute.xlu0 %1593
    %v1596 = vmul.f32 %v1580, %v1594
    %1598 = vrot.lane.b32.xlu0 %v1596, 32
    %v1599 = vpop.permute.xlu0 %1598
    %v1601 = vadd.f32 %v1590, %v1599
    %v1603 = vrot.slane %v1402, 2
    %v1605 = vmul.f32 %v1586, %v1603
    %v1606 = vtanh.pop %v1574
    %1608 = vrot.lane.b32.xlu0 %v1606, 64
    %v1609 = vpop.permute.xlu0 %1608
    %v1611 = vmul.f32 %v1586, %v1609
    %1613 = vrot.lane.b32.xlu0 %v1611, 32
    %v1614 = vpop.permute.xlu0 %1613
    %v1616 = vadd.f32 %v1605, %v1614
    %v1617 = vtanh.pop %v1601
    %1619 = vrot.lane.b32.xlu0 %v1617, 64
    %v1620 = vpop.permute.xlu0 %1619
    %v1622 = vmul.f32 %v1580, %v1620
    %v1623 = vtanh.pop %v1616
    %1625 = vrot.lane.b32.xlu0 %v1623, 64
    %v1626 = vpop.permute.xlu0 %1625
    %v1628 = vmul.f32 %v1586, %v1626
    %v1630 = vrot.slane %v1622, 4
    %1631 = vrot.lane.b32.xlu0 %v1630, 32
    %v1632 = vpop.permute.xlu0 %1631
    %v1633 = vsel %vm66, %v1632, 0
    %1635 = vmatprep.subr.mxu0 0.0
    %1636 = vmatpush1.msra.mxu0 0.0
    %1637 = vmatprep.subr.mxu0 0.0
    %1638 = vmatpush1.msra.mxu0 0.0
    %1639 = vmatprep.subr.mxu0 0.0
    %1640 = vmatpush1.msra.mxu0 0.0
    %1641 = vmatprep.subr.mxu0 0.0
    %1642 = vmatpush1.msra.mxu0 0.0
    %1643 = vmatprep.subr.mxu0 0.0
    %1644 = vmatpush1.msra.mxu0 0.0
    %1645 = vmatprep.subr.mxu0 0.0
    %1646 = vmatpush1.msra.mxu0 0.0
    %1647 = vmatprep.subr.mxu0 0.0
    %1648 = vmatpush1.msra.mxu0 0.0
    %1649 = vmatprep.subr.mxu0 0.0
    %1650 = vmatpush1.msra.mxu0 0.0
    %1651 = vmatprep.subr.mxu0 0.0
    %1652 = vmatpush1.msra.mxu0 0.0
    %1653 = vmatprep.subr.mxu0 0.0
    %1654 = vmatpush1.msra.mxu0 0.0
    %1655 = vmatprep.subr.mxu0 0.0
    %1656 = vmatpush1.msra.mxu0 0.0
    %1657 = vmatprep.subr.mxu0 0.0
    %1658 = vmatpush1.msra.mxu0 0.0
    %1659 = vmatprep.subr.mxu0 0.0
    %1660 = vmatpush1.msra.mxu0 %v153
    %1661 = vmatprep.subr.mxu0 0.0
    %1662 = vmatpush1.msra.mxu0 %v152
    %1663 = vmatprep.subr.mxu0 0.0
    %1664 = vmatpush1.msra.mxu0 %v151
    %1665 = vmatprep.subr.mxu0 0.0
    %1666 = vmatpush1.msra.mxu0 %v150
    %1667 = vmatprep.subr.mxu0 0.0
    %1668 = vmatpush2.msra.mxu0 0.0
    %1669 = vmatprep.subr.mxu0 0.0
    %1670 = vmatpush2.msra.mxu0 0.0
    %1671 = vmatprep.subr.mxu0 0.0
    %1672 = vmatpush2.msra.mxu0 0.0
    %1673 = vmatprep.subr.mxu0 0.0
    %1674 = vmatpush2.msra.mxu0 0.0
    %1675 = vmatprep.subr.mxu0 0.0
    %1676 = vmatpush2.msra.mxu0 0.0
    %1677 = vmatprep.subr.mxu0 0.0
    %1678 = vmatpush2.msra.mxu0 0.0
    %1679 = vmatprep.subr.mxu0 0.0
    %1680 = vmatpush2.msra.mxu0 0.0
    %1681 = vmatprep.subr.mxu0 0.0
    %1682 = vmatpush2.msra.mxu0 0.0
    %1683 = vmatprep.subr.mxu0 0.0
    %1684 = vmatpush2.msra.mxu0 0.0
    %1685 = vmatprep.subr.mxu0 0.0
    %1686 = vmatpush2.msra.mxu0 0.0
    %1687 = vmatprep.subr.mxu0 0.0
    %1688 = vmatpush2.msra.mxu0 0.0
    %1689 = vmatprep.subr.mxu0 0.0
    %1690 = vmatpush2.msra.mxu0 0.0
    %1691 = vmatprep.subr.mxu0 0.0
    %1692 = vmatpush2.msra.mxu0 0.0
    %1693 = vmatprep.subr.mxu0 0.0
    %1694 = vmatpush2.msra.mxu0 0.0
    %1695 = vmatprep.subr.mxu0 0.0
    %1696 = vmatpush2.msra.mxu0 0.0
    %1697 = vmatprep.subr.mxu0 0.0
    %1698 = vmatpush2.msra.mxu0 0.0
    %1699 = vmatprep.mubr.f32.mxu0 0.0
    %1700 = vmatmul.mubr.f32.gmra.mxu0 %v1633
    %v1701 = vpop.f32.mrf.mxu0
    %v1702 = vadd.f32 0.0, %v1701
    %v1703 = vpop.f32.mrf.mxu0
    %1704 = vdwg.mxu0
    %v1706 = vrot.slane %v1702, 2
    %v1708 = vadd.f32 %v146, %v1706
    %v1710 = vrot.slane %v1628, 2
    %1711 = vrot.lane.b32.xlu0 %v1710, 32
    %v1712 = vpop.permute.xlu0 %1711
    %v1713 = vsel %vm66, %v1712, 0
    %1715 = vmatprep.subr.mxu0 0.0
    %1716 = vmatpush1.msra.mxu0 0.0
    %1717 = vmatprep.subr.mxu0 0.0
    %1718 = vmatpush1.msra.mxu0 0.0
    %1719 = vmatprep.subr.mxu0 0.0
    %1720 = vmatpush1.msra.mxu0 0.0
    %1721 = vmatprep.subr.mxu0 0.0
    %1722 = vmatpush1.msra.mxu0 0.0
    %1723 = vmatprep.subr.mxu0 0.0
    %1724 = vmatpush1.msra.mxu0 0.0
    %1725 = vmatprep.subr.mxu0 0.0
    %1726 = vmatpush1.msra.mxu0 0.0
    %1727 = vmatprep.subr.mxu0 0.0
    %1728 = vmatpush1.msra.mxu0 0.0
    %1729 = vmatprep.subr.mxu0 0.0
    %1730 = vmatpush1.msra.mxu0 0.0
    %1731 = vmatprep.subr.mxu0 0.0
    %1732 = vmatpush1.msra.mxu0 0.0
    %1733 = vmatprep.subr.mxu0 0.0
    %1734 = vmatpush1.msra.mxu0 0.0
    %1735 = vmatprep.subr.mxu0 0.0
    %1736 = vmatpush1.msra.mxu0 0.0
    %1737 = vmatprep.subr.mxu0 0.0
    %1738 = vmatpush1.msra.mxu0 0.0
    %1739 = vmatprep.subr.mxu0 0.0
    %1740 = vmatpush1.msra.mxu0 %v157
    %1741 = vmatprep.subr.mxu0 0.0
    %1742 = vmatpush1.msra.mxu0 %v156
    %1743 = vmatprep.subr.mxu0 0.0
    %1744 = vmatpush1.msra.mxu0 %v155
    %1745 = vmatprep.subr.mxu0 0.0
    %1746 = vmatpush1.msra.mxu0 %v154
    %1747 = vmatprep.subr.mxu0 0.0
    %1748 = vmatpush2.msra.mxu0 0.0
    %1749 = vmatprep.subr.mxu0 0.0
    %1750 = vmatpush2.msra.mxu0 0.0
    %1751 = vmatprep.subr.mxu0 0.0
    %1752 = vmatpush2.msra.mxu0 0.0
    %1753 = vmatprep.subr.mxu0 0.0
    %1754 = vmatpush2.msra.mxu0 0.0
    %1755 = vmatprep.subr.mxu0 0.0
    %1756 = vmatpush2.msra.mxu0 0.0
    %1757 = vmatprep.subr.mxu0 0.0
    %1758 = vmatpush2.msra.mxu0 0.0
    %1759 = vmatprep.subr.mxu0 0.0
    %1760 = vmatpush2.msra.mxu0 0.0
    %1761 = vmatprep.subr.mxu0 0.0
    %1762 = vmatpush2.msra.mxu0 0.0
    %1763 = vmatprep.subr.mxu0 0.0
    %1764 = vmatpush2.msra.mxu0 0.0
    %1765 = vmatprep.subr.mxu0 0.0
    %1766 = vmatpush2.msra.mxu0 0.0
    %1767 = vmatprep.subr.mxu0 0.0
    %1768 = vmatpush2.msra.mxu0 0.0
    %1769 = vmatprep.subr.mxu0 0.0
    %1770 = vmatpush2.msra.mxu0 0.0
    %1771 = vmatprep.subr.mxu0 0.0
    %1772 = vmatpush2.msra.mxu0 0.0
    %1773 = vmatprep.subr.mxu0 0.0
    %1774 = vmatpush2.msra.mxu0 0.0
    %1775 = vmatprep.subr.mxu0 0.0
    %1776 = vmatpush2.msra.mxu0 0.0
    %1777 = vmatprep.subr.mxu0 0.0
    %1778 = vmatpush2.msra.mxu0 0.0
    %1779 = vmatprep.mubr.f32.mxu0 0.0
    %1780 = vmatmul.mubr.f32.gmra.mxu0 %v1713
    %v1781 = vpop.f32.mrf.mxu0
    %v1782 = vadd.f32 0.0, %v1781
    %v1783 = vpop.f32.mrf.mxu0
    %1784 = vdwg.mxu0
    %v1785 = vadd.f32 %v142, %v1782
    %v1786 = vxor.u32 %v1708, 2147483648
    %v1787 = vmul.f32 %v1786, 1.442695
    %v1788 = vpow.pop %v1787
    %v1789 = vadd.f32 %v1788, 1.0
    %v1790 = vrcp.pop %v1789
    %v1791 = vmul.f32 1.0, %v1790
    %v1792 = vxor.u32 %v1785, 2147483648
    %v1793 = vmul.f32 %v1792, 1.442695
    %v1794 = vpow.pop %v1793
    %v1795 = vadd.f32 %v1794, 1.0
    %v1796 = vrcp.pop %v1795
    %v1797 = vmul.f32 1.0, %v1796
    %v1799 = vrot.slane %v1601, 6
    %v1801 = vmul.f32 %v1791, %v1799
    %v1802 = vtanh.pop %v1708
    %1804 = vrot.lane.b32.xlu0 %v1802, 64
    %v1805 = vpop.permute.xlu0 %1804
    %v1807 = vmul.f32 %v1791, %v1805
    %1809 = vrot.lane.b32.xlu0 %v1807, 32
    %v1810 = vpop.permute.xlu0 %1809
    %v1812 = vadd.f32 %v1801, %v1810
    %v1814 = vrot.slane %v1616, 2
    %v1816 = vmul.f32 %v1797, %v1814
    %v1817 = vtanh.pop %v1785
    %1819 = vrot.lane.b32.xlu0 %v1817, 64
    %v1820 = vpop.permute.xlu0 %1819
    %v1822 = vmul.f32 %v1797, %v1820
    %1824 = vrot.lane.b32.xlu0 %v1822, 32
    %v1825 = vpop.permute.xlu0 %1824
    %v1827 = vadd.f32 %v1816, %v1825
    %v1828 = vtanh.pop %v1812
    %1830 = vrot.lane.b32.xlu0 %v1828, 64
    %v1831 = vpop.permute.xlu0 %1830
    %v1833 = vmul.f32 %v1791, %v1831
    %v1834 = vtanh.pop %v1827
    %1836 = vrot.lane.b32.xlu0 %v1834, 64
    %v1837 = vpop.permute.xlu0 %1836
    %v1839 = vmul.f32 %v1797, %v1837
    %v1840 = vadd.f32 %v347, %v1839
    %v1841 = vadd.f32 %v560, %v1628
    %v1842 = vadd.f32 %v774, %v1414
    %v1843 = vadd.f32 %v985, %v1201
    %v1844 = vadd.f32 %v1195, %v991
    %v1845 = vadd.f32 %v1408, %v780
    %v1846 = vadd.f32 %v1622, %v566
    %v1847 = vadd.f32 %v1833, %v353
    %vm1848 = vcmask 1041408
    %v1849 = vsel %vm1848, %v1840, %v1841
    %vm1850 = vcmask 1043456
    %v1851 = vsel %vm1850, %v1849, %v1842
    %vm1852 = vcmask 1045504
    %v1853 = vsel %vm1852, %v1851, %v1843
    %v1854 = vsel %vm1848, %v1844, %v1845
    %v1855 = vsel %vm1850, %v1854, %v1846
    %v1856 = vsel %vm1852, %v1855, %v1847
    %v1857 = vld [vmem:[%s5] sm:$0xff]
    %v1858 = vld [vmem:[%s5 + $0x8] sm:$0xff]
    %v1859 = vld [vmem:[%s5 + $0x10] sm:$0xff]
    %v1860 = vld [vmem:[%s5 + $0x18] sm:$0xff]
    %v1861 = vld [vmem:[%s6] sm:$0x1]
    %v1863 = vlaneseq
    %v1864 = vshrl.u32 %v1863, 7
    %v1865 = vsub.s32 0, %v1864
    %v1866 = vrot.slane %v1861, %v1865
    %1870 = vrot.lane.b32.xlu0 %v1853, 32
    %v1871 = vpop.permute.xlu0 %1870
    %1872 = vrot.lane.b32.xlu0 %v1856, 32
    %v1873 = vpop.permute.xlu0 %1872
    %v1874 = vsel %vm66, %v1871, 0
    %v1876 = vsel %vm66, %v1873, 0
    %1878 = vmatprep.subr.mxu0 0.0
    %1879 = vmatpush1.msra.mxu0 0.0
    %1880 = vmatprep.subr.mxu0 0.0
    %1881 = vmatpush1.msra.mxu0 0.0
    %1882 = vmatprep.subr.mxu0 0.0
    %1883 = vmatpush1.msra.mxu0 0.0
    %1884 = vmatprep.subr.mxu0 0.0
    %1885 = vmatpush1.msra.mxu0 0.0
    %1886 = vmatprep.subr.mxu0 0.0
    %1887 = vmatpush1.msra.mxu0 0.0
    %1888 = vmatprep.subr.mxu0 0.0
    %1889 = vmatpush1.msra.mxu0 0.0
    %1890 = vmatprep.subr.mxu0 0.0
    %1891 = vmatpush1.msra.mxu0 0.0
    %1892 = vmatprep.subr.mxu0 0.0
    %1893 = vmatpush1.msra.mxu0 0.0
    %1894 = vmatprep.subr.mxu0 0.0
    %1895 = vmatpush1.msra.mxu0 0.0
    %1896 = vmatprep.subr.mxu0 0.0
    %1897 = vmatpush1.msra.mxu0 0.0
    %1898 = vmatprep.subr.mxu0 0.0
    %1899 = vmatpush1.msra.mxu0 0.0
    %1900 = vmatprep.subr.mxu0 0.0
    %1901 = vmatpush1.msra.mxu0 0.0
    %1902 = vmatprep.subr.mxu0 0.0
    %1903 = vmatpush1.msra.mxu0 %v1860
    %1904 = vmatprep.subr.mxu0 0.0
    %1905 = vmatpush1.msra.mxu0 %v1859
    %1906 = vmatprep.subr.mxu0 0.0
    %1907 = vmatpush1.msra.mxu0 %v1858
    %1908 = vmatprep.subr.mxu0 0.0
    %1909 = vmatpush1.msra.mxu0 %v1857
    %1910 = vmatprep.subr.mxu0 0.0
    %1911 = vmatpush2.msra.mxu0 0.0
    %1912 = vmatprep.subr.mxu0 0.0
    %1913 = vmatpush2.msra.mxu0 0.0
    %1914 = vmatprep.subr.mxu0 0.0
    %1915 = vmatpush2.msra.mxu0 0.0
    %1916 = vmatprep.subr.mxu0 0.0
    %1917 = vmatpush2.msra.mxu0 0.0
    %1918 = vmatprep.subr.mxu0 0.0
    %1919 = vmatpush2.msra.mxu0 0.0
    %1920 = vmatprep.subr.mxu0 0.0
    %1921 = vmatpush2.msra.mxu0 0.0
    %1922 = vmatprep.subr.mxu0 0.0
    %1923 = vmatpush2.msra.mxu0 0.0
    %1924 = vmatprep.subr.mxu0 0.0
    %1925 = vmatpush2.msra.mxu0 0.0
    %1926 = vmatprep.subr.mxu0 0.0
    %1927 = vmatpush2.msra.mxu0 0.0
    %1928 = vmatprep.subr.mxu0 0.0
    %1929 = vmatpush2.msra.mxu0 0.0
    %1930 = vmatprep.subr.mxu0 0.0
    %1931 = vmatpush2.msra.mxu0 0.0
    %1932 = vmatprep.subr.mxu0 0.0
    %1933 = vmatpush2.msra.mxu0 0.0
    %1934 = vmatprep.subr.mxu0 0.0
    %1935 = vmatpush2.msra.mxu0 0.0
    %1936 = vmatprep.subr.mxu0 0.0
    %1937 = vmatpush2.msra.mxu0 0.0
    %1938 = vmatprep.subr.mxu0 0.0
    %1939 = vmatpush2.msra.mxu0 0.0
    %1940 = vmatprep.subr.mxu0 0.0
    %1941 = vmatpush2.msra.mxu0 0.0
    %1942 = vmatprep.mubr.f32.mxu0 0.0
    %1943 = vmatmul.mubr.f32.gmra.mxu0 %v1874
    %v1944 = vpop.f32.mrf.mxu0
    %v1945 = vadd.f32 %v1866, %v1944
    %v1946 = vpop.f32.mrf.mxu0
    %1947 = vmatprep.mubr.f32.mxu0 0.0
    %1948 = vmatmul.mubr.f32.gmra.mxu0 %v1876
    %v1949 = vpop.f32.mrf.mxu0
    %v1950 = vadd.f32 %v1866, %v1949
    %v1951 = vpop.f32.mrf.mxu0
    %1952 = vdwg.mxu0
    %v1953 = vmax.f32 %v1945, 0.0
    %v1954 = vmax.f32 %v1950, 0.0
    %v1955 = vld [vmem:[%s7] sm:$0x1]
    %v1957 = vlaneseq
    %v1958 = vshrl.u32 %v1957, 7
    %v1959 = vsub.s32 0, %v1958
    %v1960 = vrot.slane %v1955, %v1959
    %v1962 = vmul.f32 %v1953, %v1960
    %v1963 = vmul.f32 %v1954, %v1960
    %vm1964 = vcmask 195584
    %v1965 = vsel %vm1964, %v1962, 0.0
    %1966 = vadd.xlane.f32.xlu0 %v1965
    %v1967 = vpop.xlane.xlu0 %1966
    %v1968 = vsel %vm1964, %v1963, 0.0
    %1969 = vadd.xlane.f32.xlu0 %v1968
    %v1970 = vpop.xlane.xlu0 %1969
    %v1971 = vld [vmem:[#allocation2] sm:$0x1]
    %v1973 = vlaneseq
    %v1974 = vshrl.u32 %v1973, 7
    %v1975 = vsub.s32 0, %v1974
    %v1976 = vrot.slane %v1971, %v1975
    %v1978 = vadd.f32 %v1967, %v1976
    %v1979 = vadd.f32 %v1970, %v1976
    %v1981 = vrot.slane %v1978, 2
    %1982 = vrot.lane.b32.xlu0 %v1981, 1
    %v1983 = vpop.permute.xlu0 %1982
    %v1985 = vrot.slane %v1978, 4
    %1986 = vrot.lane.b32.xlu0 %v1985, 2
    %v1987 = vpop.permute.xlu0 %1986
    %v1989 = vrot.slane %v1978, 6
    %1990 = vrot.lane.b32.xlu0 %v1989, 3
    %v1991 = vpop.permute.xlu0 %1990
    %1994 = vrot.lane.b32.xlu0 %v1979, 4
    %v1995 = vpop.permute.xlu0 %1994
    %v1997 = vrot.slane %v1979, 2
    %1998 = vrot.lane.b32.xlu0 %v1997, 5
    %v1999 = vpop.permute.xlu0 %1998
    %v2001 = vrot.slane %v1979, 4
    %2002 = vrot.lane.b32.xlu0 %v2001, 6
    %v2003 = vpop.permute.xlu0 %2002
    %v2005 = vrot.slane %v1979, 6
    %2006 = vrot.lane.b32.xlu0 %v2005, 7
    %v2007 = vpop.permute.xlu0 %2006
    %vm2009 = vcmask 7168
    %v2010 = vsel %vm2009, %v1978, %v1983
    %vm2011 = vcmask 15360
    %v2012 = vsel %vm2011, %v2010, %v1987
    %vm2013 = vcmask 23552
    %v2014 = vsel %vm2013, %v2012, %v1991
    %vm2015 = vcmask 31744
    %v2016 = vsel %vm2015, %v2014, %v1995
    %vm2017 = vcmask 39936
    %v2018 = vsel %vm2017, %v2016, %v1999
    %vm2019 = vcmask 48128
    %v2020 = vsel %vm2019, %v2018, %v2003
    %vm2021 = vcmask 56320
    %v2022 = vsel %vm2021, %v2020, %v2007
    %vm2023 = vcmask 58368
    %v2024 = vsel %vm2023, %v2022, -inf
    %2025 = vmax.xlane.f32.xlu0 %v2024
    %v2026 = vpop.xlane.xlu0 %2025
    %v2027 = vsub.f32 %v2022, %v2026
    %v2028 = vmul.f32 %v2027, 1.442695
    %v2029 = vpow.pop %v2028
    %v2030 = vsel %vm2023, %v2029, 0.0
    %2031 = vadd.xlane.f32.xlu0 %v2030
    %v2032 = vpop.xlane.xlu0 %2031
    %v2033 = vrcp.pop %v2032
    %v2034 = vmul.f32 %v2032, %v2033
    %v2035 = vsub.f32 2.0, %v2034
    %v2036 = vmul.f32 %v2033, %v2035
    %v2037 = vmul.f32 %v2029, %v2036
    %2038 = vst.msk [vmem:[#allocation5] sm:$0x3] %vm2023, %v2037
    %2040 = vset.pattern.permute.xlu0 0
    %2041 = vperm.xlu0 %2040, %v2037
    %v2042 = vpop.permute.xlu0 %2041
    %v2044 = vmul.f32 %v2042, %v1840
    %2045 = vset.pattern.permute.xlu0 1
    %2046 = vperm.xlu0 %2045, %v2037
    %v2047 = vpop.permute.xlu0 %2046
    %v2050 = vrot.slane %v1841, 2
    %2051 = vrot.lane.b32.xlu0 %v2050, 32
    %v2052 = vpop.permute.xlu0 %2051
    %v2054 = vmul.f32 %v2047, %v2052
    %2056 = vrot.lane.b32.xlu0 %v2054, 96
    %v2057 = vpop.permute.xlu0 %2056
    %v2059 = vadd.f32 %v2044, %v2057
    %2060 = vset.pattern.permute.xlu0 2
    %2061 = vperm.xlu0 %2060, %v2037
    %v2062 = vpop.permute.xlu0 %2061
    %v2065 = vrot.slane %v1842, 4
    %2066 = vrot.lane.b32.xlu0 %v2065, 32
    %v2067 = vpop.permute.xlu0 %2066
    %v2069 = vmul.f32 %v2062, %v2067
    %2071 = vrot.lane.b32.xlu0 %v2069, 96
    %v2072 = vpop.permute.xlu0 %2071
    %v2074 = vadd.f32 %v2059, %v2072
    %2075 = vset.pattern.permute.xlu0 3
    %2076 = vperm.xlu0 %2075, %v2037
    %v2077 = vpop.permute.xlu0 %2076
    %v2080 = vrot.slane %v1843, 6
    %2081 = vrot.lane.b32.xlu0 %v2080, 32
    %v2082 = vpop.permute.xlu0 %2081
    %v2084 = vmul.f32 %v2077, %v2082
    %2086 = vrot.lane.b32.xlu0 %v2084, 96
    %v2087 = vpop.permute.xlu0 %2086
    %v2089 = vadd.f32 %v2074, %v2087
    %2090 = vset.pattern.permute.xlu0 4
    %2091 = vperm.xlu0 %2090, %v2037
    %v2092 = vpop.permute.xlu0 %2091
    %v2094 = vmul.f32 %v2092, %v1844
    %v2095 = vadd.f32 %v2089, %v2094
    %2096 = vset.pattern.permute.xlu0 5
    %2097 = vperm.xlu0 %2096, %v2037
    %v2098 = vpop.permute.xlu0 %2097
    %v2101 = vrot.slane %v1845, 2
    %2102 = vrot.lane.b32.xlu0 %v2101, 32
    %v2103 = vpop.permute.xlu0 %2102
    %v2105 = vmul.f32 %v2098, %v2103
    %2107 = vrot.lane.b32.xlu0 %v2105, 96
    %v2108 = vpop.permute.xlu0 %2107
    %v2110 = vadd.f32 %v2095, %v2108
    %2111 = vset.pattern.permute.xlu0 6
    %2112 = vperm.xlu0 %2111, %v2037
    %v2113 = vpop.permute.xlu0 %2112
    %v2116 = vrot.slane %v1846, 4
    %2117 = vrot.lane.b32.xlu0 %v2116, 32
    %v2118 = vpop.permute.xlu0 %2117
    %v2120 = vmul.f32 %v2113, %v2118
    %2122 = vrot.lane.b32.xlu0 %v2120, 96
    %v2123 = vpop.permute.xlu0 %2122
    %v2125 = vadd.f32 %v2110, %v2123
    %2126 = vset.pattern.permute.xlu0 7
    %2127 = vperm.xlu0 %2126, %v2037
    %v2128 = vpop.permute.xlu0 %2127
    %v2131 = vrot.slane %v1847, 6
    %2132 = vrot.lane.b32.xlu0 %v2131, 32
    %v2133 = vpop.permute.xlu0 %2132
    %v2135 = vmul.f32 %v2128, %v2133
    %2137 = vrot.lane.b32.xlu0 %v2135, 96
    %v2138 = vpop.permute.xlu0 %2137
    %v2140 = vadd.f32 %v2125, %v2138
    %v2141 = vld [vmem:[%s9] sm:$0xff]
    %v2142 = vld [vmem:[%s9 + $0x8] sm:$0xff]
    %v2143 = vld [vmem:[%s9 + $0x10] sm:$0xff]
    %v2144 = vld [vmem:[%s9 + $0x18] sm:$0xff]
    %v2145 = vld [vmem:[%s10] sm:$0x1]
    %v2147 = vlaneseq
    %v2148 = vshrl.u32 %v2147, 7
    %v2149 = vsub.s32 0, %v2148
    %v2150 = vrot.slane %v2145, %v2149
    %2153 = vrot.lane.b32.xlu0 %v2140, 32
    %v2154 = vpop.permute.xlu0 %2153
    %v2155 = vsel %vm66, %v2154, 0
    %2157 = vmatprep.subr.mxu0 0.0
    %2158 = vmatpush1.msra.mxu0 0.0
    %2159 = vmatprep.subr.mxu0 0.0
    %2160 = vmatpush1.msra.mxu0 0.0
    %2161 = vmatprep.subr.mxu0 0.0
    %2162 = vmatpush1.msra.mxu0 0.0
    %2163 = vmatprep.subr.mxu0 0.0
    %2164 = vmatpush1.msra.mxu0 0.0
    %2165 = vmatprep.subr.mxu0 0.0
    %2166 = vmatpush1.msra.mxu0 0.0
    %2167 = vmatprep.subr.mxu0 0.0
    %2168 = vmatpush1.msra.mxu0 0.0
    %2169 = vmatprep.subr.mxu0 0.0
    %2170 = vmatpush1.msra.mxu0 0.0
    %2171 = vmatprep.subr.mxu0 0.0
    %2172 = vmatpush1.msra.mxu0 0.0
    %2173 = vmatprep.subr.mxu0 0.0
    %2174 = vmatpush1.msra.mxu0 0.0
    %2175 = vmatprep.subr.mxu0 0.0
    %2176 = vmatpush1.msra.mxu0 0.0
    %2177 = vmatprep.subr.mxu0 0.0
    %2178 = vmatpush1.msra.mxu0 0.0
    %2179 = vmatprep.subr.mxu0 0.0
    %2180 = vmatpush1.msra.mxu0 0.0
    %2181 = vmatprep.subr.mxu0 0.0
    %2182 = vmatpush1.msra.mxu0 %v2144
    %2183 = vmatprep.subr.mxu0 0.0
    %2184 = vmatpush1.msra.mxu0 %v2143
    %2185 = vmatprep.subr.mxu0 0.0
    %2186 = vmatpush1.msra.mxu0 %v2142
    %2187 = vmatprep.subr.mxu0 0.0
    %2188 = vmatpush1.msra.mxu0 %v2141
    %2189 = vmatprep.subr.mxu0 0.0
    %2190 = vmatpush2.msra.mxu0 0.0
    %2191 = vmatprep.subr.mxu0 0.0
    %2192 = vmatpush2.msra.mxu0 0.0
    %2193 = vmatprep.subr.mxu0 0.0
    %2194 = vmatpush2.msra.mxu0 0.0
    %2195 = vmatprep.subr.mxu0 0.0
    %2196 = vmatpush2.msra.mxu0 0.0
    %2197 = vmatprep.subr.mxu0 0.0
    %2198 = vmatpush2.msra.mxu0 0.0
    %2199 = vmatprep.subr.mxu0 0.0
    %2200 = vmatpush2.msra.mxu0 0.0
    %2201 = vmatprep.subr.mxu0 0.0
    %2202 = vmatpush2.msra.mxu0 0.0
    %2203 = vmatprep.subr.mxu0 0.0
    %2204 = vmatpush2.msra.mxu0 0.0
    %2205 = vmatprep.subr.mxu0 0.0
    %2206 = vmatpush2.msra.mxu0 0.0
    %2207 = vmatprep.subr.mxu0 0.0
    %2208 = vmatpush2.msra.mxu0 0.0
    %2209 = vmatprep.subr.mxu0 0.0
    %2210 = vmatpush2.msra.mxu0 0.0
    %2211 = vmatprep.subr.mxu0 0.0
    %2212 = vmatpush2.msra.mxu0 0.0
    %2213 = vmatprep.subr.mxu0 0.0
    %2214 = vmatpush2.msra.mxu0 0.0
    %2215 = vmatprep.subr.mxu0 0.0
    %2216 = vmatpush2.msra.mxu0 0.0
    %2217 = vmatprep.subr.mxu0 0.0
    %2218 = vmatpush2.msra.mxu0 0.0
    %2219 = vmatprep.subr.mxu0 0.0
    %2220 = vmatpush2.msra.mxu0 0.0
    %2221 = vmatprep.mubr.f32.mxu0 0.0
    %2222 = vmatmul.mubr.f32.gmra.mxu0 %v2155
    %v2223 = vpop.f32.mrf.mxu0
    %v2224 = vadd.f32 %v2150, %v2223
    %v2225 = vpop.f32.mrf.mxu0
    %2226 = vdwg.mxu0
    %vm2227 = vcmask 25600
    %2228 = vst.msk [vmem:[#allocation3] sm:$0x3] %vm2227, %v2224
    // Predicated region
    $region46: #{rnn_attn_cls_forward.1} parent=1 // pred_check
      _
    $region47: #{rnn_attn_cls_forward.1} parent=1 // pred_check_branch
      %2230 = sbr.rel (0) target = $region49
    $region48: #{rnn_attn_cls_forward.1} parent=1 // pred_region
      %s2232 = ssub.s32 32, 32
      %2233 = vsyncadd [#allocation4], %s2232
      %s2235 = sshll.u32 [#allocation3], 4
      %s2236 = int_to_ptr.vmem [resolvable:$true] %s2235
      %2238 = dma.vmem_to_hbm [thread:$0]  %s2236, 32, %s11, [#allocation4]
    $region49: #{rnn_attn_cls_forward.1} parent=1 // pred_fallthru
      _
    // Predicated region
    $region50: #{rnn_attn_cls_forward.1} parent=1 // pred_check
      _
    $region51: #{rnn_attn_cls_forward.1} parent=1 // pred_check_branch
      %2240 = sbr.rel (0) target = $region53
    $region52: #{rnn_attn_cls_forward.1} parent=1 // pred_region
      %s2242 = ssub.s32 32, 32
      %2243 = vsyncadd [#allocation6], %s2242
      %s2245 = sshll.u32 [#allocation5], 4
      %s2246 = int_to_ptr.vmem [resolvable:$true] %s2245
      %2248 = dma.vmem_to_hbm [thread:$0]  %s2246, 32, %s12, [#allocation6]
    $region53: #{rnn_attn_cls_forward.1} parent=1 // pred_fallthru
      _
    // Predicated region
    $region54: #{rnn_attn_cls_forward.1} parent=1 // pred_check
      _
    $region55: #{rnn_attn_cls_forward.1} parent=1 // pred_check_branch
      %2250 = sbr.rel (0) target = $region57
    $region56: #{rnn_attn_cls_forward.1} parent=1 // pred_region
      %2251 = dma.done [#allocation4], 32
    $region57: #{rnn_attn_cls_forward.1} parent=1 // pred_fallthru
      _
    // Predicated region
    $region58: #{rnn_attn_cls_forward.1} parent=1 // pred_check
      _
    $region59: #{rnn_attn_cls_forward.1} parent=1 // pred_check_branch
      %2253 = sbr.rel (0) target = $region61
    $region60: #{rnn_attn_cls_forward.1} parent=1 // pred_region
      %2254 = dma.done [#allocation6], 32
    $region61: #{rnn_attn_cls_forward.1} parent=1 // pred_fallthru
      _
    %2255 = vsyncpa [#allocation4], 1
    %2256 = vsyncpa [#allocation6], 1

</llo_original>
